<compile_context>
chip_gen: v7x
topology: tpu7x:2x2x1
jax: 0.10.0
libtpu: 0.0.40
codegen_flags: <defaults>
</compile_context>

<pallas_src>
import functools

import jax
import jax.numpy as jnp
from jax.experimental import pallas as pl
from jax.experimental.pallas import tpu as pltpu


# ---------------------------------------------------------------------------
# Pallas kernel: HMN scores for one (batch element, seq tile)
# ---------------------------------------------------------------------------
def hmn_scores_kernel(utT_ref, g1_ref,
                      w1uT_ref, w2T_ref, b2T_ref, w3T_ref, b3T_ref,
                      out_ref, m3_ref, *, hidden_size, pool_size):
    H, P = hidden_size, pool_size
    f32 = jnp.float32

    def pool_max(o, out_size):
        # Columns were permuted (and weights transposed) in the wrapper so
        # pool candidate p of output o lives at ROW p*out_size + o ->
        # contiguous 8-aligned sublane blocks, plain VPU maximum, no relayout.
        m = o[0:out_size, :]
        for p in range(1, P):
            m = jnp.maximum(m, o[p * out_size:(p + 1) * out_size, :])
        return m

    utT = utT_ref[0]                                                 # (2H, T)

    # Layer 1: (H*P, 2H) @ (2H, T).  g1 (per-batch, per-decode-step term
    # computed in the wrapper) broadcasts along the lane axis.
    o1 = jnp.dot(w1uT_ref[...], utT, preferred_element_type=f32) + g1_ref[0]
    m1 = pool_max(o1, H)                                             # (H, T) f32

    # Layer 2: (H*P, H) @ (H, T).
    o2 = (jnp.dot(w2T_ref[...], m1.astype(w2T_ref.dtype),
                  preferred_element_type=f32) + b2T_ref[...])
    m2 = pool_max(o2, H)                                             # (H, T) f32

    # Layer 3 fused into a single K=2H dot: stack m1 / m2 along sublanes in a
    # VMEM scratch (two aligned static slice stores, no concatenate).
    m3_ref[0:H, :] = m1.astype(m3_ref.dtype)
    m3_ref[H:, :] = m2.astype(m3_ref.dtype)
    o3 = (jnp.dot(w3T_ref[...], m3_ref[...], preferred_element_type=f32)
          + b3T_ref[...])                                            # (P_pad, T)

    # out_size=1 maxout: sublane max over the pool rows (padded rows carry a
    # -1e30 bias and never win) -> lane-dense (1, T) score row.
    out_ref[0] = jnp.max(o3, axis=0, keepdims=True)


# ---------------------------------------------------------------------------
# Wrapper: pallas_call on pre-processed (padded / transposed / cast) inputs
# ---------------------------------------------------------------------------
def hmn_scores(enc_T, g1, kernel_weights, *, seq_len, hidden_size, pool_size,
               block_seq=256, compute_dtype=jnp.float32):
    """HMN score for every (batch, position): returns (B, seq_len) float32.

    enc_T: (B, 2H, s_pad) already padded / cast / transposed.
    g1:    (B, H*P) float32 per-batch layer-1 term (r @ W1_r + b1).
    """
    B, D, s_pad = enc_T.shape
    H, P = hidden_size, pool_size
    assert D == 2 * H
    assert s_pad % block_seq == 0
    n_tiles = s_pad // block_seq

    w1uT, w2T, b2T, w3T, b3T = kernel_weights
    g1_col = g1.astype(jnp.float32)[..., None]                       # (B, H*P, 1)

    vmem = pl.BlockSpec(memory_space=pltpu.MemorySpace.VMEM)
    kern = functools.partial(hmn_scores_kernel, hidden_size=H, pool_size=P)

    out = pl.pallas_call(
        kern,
        out_shape=jax.ShapeDtypeStruct((B, n_tiles, block_seq), jnp.float32),
        grid_spec=pltpu.PrefetchScalarGridSpec(
            num_scalar_prefetch=0,
            grid=(B, n_tiles),
            in_specs=[
                pl.BlockSpec((1, D, block_seq), lambda b, s: (b, 0, s)),
                pl.BlockSpec((1, H * P, 1), lambda b, s: (b, 0, 0)),
                vmem, vmem, vmem,        # W1_u^T, W2^T, b2^T
                vmem, vmem,              # W3^T (stacked, padded), b3^T
            ],
            out_specs=pl.BlockSpec((1, 1, block_seq), lambda b, s: (b, s, 0)),
            scratch_shapes=[pltpu.VMEM((2 * H, block_seq), compute_dtype)],
        ),
        compiler_params=pltpu.CompilerParams(
            dimension_semantics=("parallel", "parallel")),
    )(enc_T, g1_col, w1uT, w2T, b2T, w3T, b3T)
    return out.reshape(B, s_pad)[:, :seq_len]


def prepare_encoded(encoded, block_seq, compute_dtype):
    """Pad seq to a block multiple, transpose to (B, 2H, s_pad), cast. Hoisted
    out of the decode loop: runs once per forward call."""
    B, S, D = encoded.shape
    n_tiles = -(-S // block_seq)
    s_pad = n_tiles * block_seq
    enc = encoded
    if s_pad != S:
        enc = jnp.pad(enc, ((0, 0), (0, s_pad - S), (0, 0)))
    return jnp.transpose(enc, (0, 2, 1)).astype(compute_dtype)


def prepare_kernel_weights(kernel_params, compute_dtype):
    """Cast MXU weights to compute_dtype once; biases stay f32."""
    w1uT, w2T, b2T, w3T, b3T = kernel_params
    return (w1uT.astype(compute_dtype), w2T.astype(compute_dtype),
            b2T.astype(jnp.float32), w3T.astype(compute_dtype),
            b3T.astype(jnp.float32))


def compute_g1(ptr_repr, hidden, host_params):
    """Per-batch layer-1 term, hoisted out of the kernel:
    r = tanh([ptr; h] @ Wl + bl);  g1 = r @ W1_r + b1  (permuted columns)."""
    wl_p, wl_h, bl, w1_r, b1 = host_params
    hp = jax.lax.Precision.HIGHEST
    r = jnp.tanh(jnp.matmul(ptr_repr, wl_p, precision=hp)
                 + jnp.matmul(hidden, wl_h, precision=hp) + bl)      # (B, H)
    return jnp.matmul(r, w1_r, precision=hp) + b1                    # (B, H*P)


def hmn_scores_full(encoded, ptr_repr, hidden, host_params, kernel_params, *,
                    hidden_size, pool_size, block_seq=256,
                    compute_dtype=jnp.float32):
    """Convenience path (single invocation) used by the correctness check."""
    enc_T = prepare_encoded(encoded, block_seq, compute_dtype)
    kweights = prepare_kernel_weights(kernel_params, compute_dtype)
    g1 = compute_g1(ptr_repr, hidden, host_params)
    return hmn_scores(enc_T, g1, kweights, seq_len=encoded.shape[1],
                      hidden_size=hidden_size, pool_size=pool_size,
                      block_seq=block_seq, compute_dtype=compute_dtype)


# ---------------------------------------------------------------------------
# Decode loop (plain JAX around the kernel)
# ---------------------------------------------------------------------------
def lstm_cell(x, h, c, lstm_params):
    w_ih, w_hh, b_ih, b_hh = lstm_params
    gates = x @ w_ih.T + b_ih + h @ w_hh.T + b_hh
    i, f, g, o = jnp.split(gates, 4, axis=-1)
    c_new = jax.nn.sigmoid(f) * c + jax.nn.sigmoid(i) * jnp.tanh(g)
    h_new = jax.nn.sigmoid(o) * jnp.tanh(c_new)
    return h_new, c_new


def ptr_decoder_forward(encoded, hmn_host_params, hmn_kernel_params,
                        lstm_params, *, hidden_size, pool_size, max_len,
                        block_seq=256, compute_dtype=jnp.float32):
    """Mirrors PtrDecoder.forward: per decode step, score every position with
    the HMN (fused Pallas kernel), log-softmax / argmax / gather the new
    pointer representation, and advance the LSTMCell state."""
    B, S, D = encoded.shape
    H = hidden_size

    # Hoisted out of the decode loop: pad/cast/transpose of `encoded` and the
    # kernel weight casts happen once per forward, not once per decode step.
    enc_T = prepare_encoded(encoded, block_seq, compute_dtype)
    kweights = prepare_kernel_weights(hmn_kernel_params, compute_dtype)

    ptr_repr = encoded[:, 0, :]
    h = jnp.zeros((B, H), jnp.float32)
    c = jnp.zeros((B, H), jnp.float32)
    outputs = []
    # TODO(synk): argmax/gather + LSTMCell decode control flow stays in plain
    # JAX; only the O(B*S) HMN scoring runs as a Pallas kernel.
    for _ in range(max_len):
        g1 = compute_g1(ptr_repr, h, hmn_host_params)
        scores = hmn_scores(enc_T, g1, kweights, seq_len=S,
                            hidden_size=H, pool_size=pool_size,
                            block_seq=block_seq, compute_dtype=compute_dtype)
        # Reference stacks per-position (B,) scores into (S, B) and applies
        # log_softmax over dim=-1 (the batch axis) before transposing back:
        # that is log_softmax over axis 0 of the (B, S) score matrix.
        ptrs = jax.nn.log_softmax(scores, axis=0)            # (B, S)
        ptr = jnp.argmax(ptrs, axis=1)                       # (B,)
        outputs.append(ptrs)
        ptr_repr = encoded[jnp.arange(B), ptr, :]            # (B, 2H)
        h, c = lstm_cell(ptr_repr, h, c, lstm_params)
    return jnp.stack(outputs)                                # (max_len, B, S)


# ---------------------------------------------------------------------------
# Parameter construction (PyTorch-style init) + pure-JAX reference
# ---------------------------------------------------------------------------
def _linear_params(key, in_features, out_features):
    kw, kb = jax.random.split(key)
    bound = 1.0 / float(in_features) ** 0.5
    W = jax.random.uniform(kw, (in_features, out_features), jnp.float32,
                           -bound, bound)
    b = jax.random.uniform(kb, (1, out_features), jnp.float32, -bound, bound)
    return W, b


def _permute_maxout_cols(W, b, out_size, pool_size):
    """Reorder columns from PyTorch order j = o*P + p to j' = p*out + o."""
    perm = jnp.arange(out_size * pool_size).reshape(out_size, pool_size).T.reshape(-1)
    return W[:, perm], b[:, perm]


def make_params(key, hidden_size, pool_size):
    H, P = hidden_size, pool_size
    k_lin, k1, k2, k3, k_ih, k_hh, k_bih, k_bhh = jax.random.split(key, 8)
    Wl, bl = _linear_params(k_lin, 3 * H, H)
    W1, b1 = _linear_params(k1, 3 * H, H * P)
    W2, b2 = _linear_params(k2, H, H * P)
    W3, b3 = _linear_params(k3, 2 * H, 1 * P)

    W1k, b1k = _permute_maxout_cols(W1, b1, H, P)
    W2k, b2k = _permute_maxout_cols(W2, b2, H, P)
    W3k, b3k = _permute_maxout_cols(W3, b3, 1, P)   # identity for out_size=1

    # Layer-3 weights stacked ([m1; m2] rows) and padded to a multiple of 8
    # pool rows so the in-kernel sublane max is trivially tile-aligned; padded
    # rows get a -1e30 bias so they never win the max.
    w3T = W3k.T                                               # (P, 2H)
    b3T = b3k.T                                               # (P, 1)
    p_pad = (-P) % 8
    if p_pad:
        w3T = jnp.concatenate(
            [w3T, jnp.zeros((p_pad, 2 * H), jnp.float32)], axis=0)
        b3T = jnp.concatenate(
            [b3T, jnp.full((p_pad, 1), -1e30, jnp.float32)], axis=0)

    # Host-side (plain JAX, per decode step): pieces needed for r and g1.
    hmn_host_params = (Wl[:2 * H], Wl[2 * H:], bl, W1k[2 * H:], b1k)
    # Kernel-side (VMEM-resident, transposed so seq stays on lanes).
    hmn_kernel_params = (W1k[:2 * H].T,      # (H*P, 2H)
                         W2k.T,              # (H*P, H)
                         b2k.T,              # (H*P, 1)
                         w3T,                # (P_pad, 2H)
                         b3T)                # (P_pad, 1)
    hmn_ref_params = (Wl, bl, W1, b1, W2, b2, W3, b3)

    bound = 1.0 / float(H) ** 0.5
    lstm_params = (
        jax.random.uniform(k_ih, (4 * H, 2 * H), jnp.float32, -bound, bound),
        jax.random.uniform(k_hh, (4 * H, H), jnp.float32, -bound, bound),
        jax.random.uniform(k_bih, (4 * H,), jnp.float32, -bound, bound),
        jax.random.uniform(k_bhh, (4 * H,), jnp.float32, -bound, bound))
    return hmn_host_params, hmn_kernel_params, hmn_ref_params, lstm_params


def hmn_scores_reference(encoded, ptr_repr, hidden, ref_params, H, P):
    """Pure-JAX HMN-over-all-positions with PyTorch semantics."""
    Wl, bl, W1, b1, W2, b2, W3, b3 = ref_params
    B, S, D = encoded.shape
    hp = jax.lax.Precision.HIGHEST

    def maxout(x, W, b, out):
        o = jnp.matmul(x, W, precision=hp) + b
        return o.reshape(*o.shape[:-1], out, P).max(axis=-1)

    r = jnp.tanh(jnp.matmul(jnp.concatenate([ptr_repr, hidden], axis=1), Wl,
                            precision=hp) + bl)                      # (B, H)
    r_b = jnp.broadcast_to(r[:, None, :], (B, S, H))
    ut_r = jnp.concatenate([encoded, r_b], axis=-1)                  # (B, S, 3H)
    m1 = maxout(ut_r, W1, b1, H)
    m2 = maxout(m1, W2, b2, H)
    m3 = jnp.concatenate([m1, m2], axis=-1)
    return maxout(m3, W3, b3, 1)[..., 0]                             # (B, S)


# ---------------------------------------------------------------------------
if __name__ == "__main__":
    B, S, H, P = 2, 200, 64, 4           # batch, seq_len, hidden_size, pooling
    answer_lengths = [3, 2]
    max_len = max(answer_lengths)
    BLOCK_SEQ = 256                      # covers S=200 in one tile -> grid (B, 1)

    key = jax.random.PRNGKey(0)
    k_enc, k_par = jax.random.split(key)
    encoded = jax.random.normal(k_enc, (B, S, 2 * H), jnp.float32)
    host_p, kern_p, ref_p, lstm_p = make_params(k_par, H, P)

    # --- correctness: fused HMN kernel vs pure-JAX reference ---------------
    ptr0 = encoded[:, 0, :]
    h0 = jnp.zeros((B, H), jnp.float32)
    scores_ref = hmn_scores_reference(encoded, ptr0, h0, ref_p, H, P)

    scores_f32 = hmn_scores_full(encoded, ptr0, h0, host_p, kern_p,
                                 hidden_size=H, pool_size=P,
                                 block_seq=BLOCK_SEQ,
                                 compute_dtype=jnp.float32)
    scores_f32 = jax.block_until_ready(scores_f32)
    assert scores_f32.shape == (B, S)
    assert jnp.allclose(scores_f32, scores_ref, atol=2e-3, rtol=2e-3), \
        float(jnp.max(jnp.abs(scores_f32 - scores_ref)))

    scores_bf16 = hmn_scores_full(encoded, ptr0, h0, host_p, kern_p,
                                  hidden_size=H, pool_size=P,
                                  block_seq=BLOCK_SEQ,
                                  compute_dtype=jnp.bfloat16)
    scores_bf16 = jax.block_until_ready(scores_bf16)
    assert jnp.allclose(scores_bf16, scores_ref, atol=5e-2, rtol=5e-2), \
        float(jnp.max(jnp.abs(scores_bf16 - scores_ref)))

    # --- full PtrDecoder forward (decode loop around the fused kernel) -----
    fwd = jax.jit(functools.partial(
        ptr_decoder_forward, hidden_size=H, pool_size=P, max_len=max_len,
        block_seq=BLOCK_SEQ, compute_dtype=jnp.float32))
    out = jax.block_until_ready(fwd(encoded, host_p, kern_p, lstm_p))
    assert out.shape == (max_len, B, S)
    assert bool(jnp.all(jnp.isfinite(out)))

    print("KERNEL_OK")
</pallas_src>

<mosaic_0001>
module attributes {stable_mosaic.version = 11 : i64} {
  func.func @hmn_scores_kernel(%arg0: i32, %arg1: i32, %arg2: memref<1x128x256xf32, #tpu.memory_space<vmem>>, %arg3: memref<1x256x1xf32, #tpu.memory_space<vmem>>, %arg4: memref<256x128xf32, #tpu.memory_space<vmem>>, %arg5: memref<256x64xf32, #tpu.memory_space<vmem>>, %arg6: memref<256x1xf32, #tpu.memory_space<vmem>>, %arg7: memref<8x128xf32, #tpu.memory_space<vmem>>, %arg8: memref<8x1xf32, #tpu.memory_space<vmem>>, %arg9: memref<1x1x256xf32, #tpu.memory_space<vmem>>, %arg10: memref<128x256xf32, #tpu.memory_space<vmem>>) attributes {dimension_semantics = [#tpu.dimension_semantics<parallel>, #tpu.dimension_semantics<parallel>], iteration_bounds = array<i64: 2, 1>, scalar_prefetch = 0 : i64, scratch_operands = 1 : i64, tpu.core_type = #tpu.core_type<tc>, window_params = [{transform_indices = @transform_0, window_bounds = array<i64: 1, 128, 256>}, {transform_indices = @transform_1, window_bounds = array<i64: 1, 256, 1>}, {pipeline_mode = #tpu.pipeline_mode<synchronous>, transform_indices = @transform_2, window_bounds = array<i64: 256, 128>}, {pipeline_mode = #tpu.pipeline_mode<synchronous>, transform_indices = @transform_3, window_bounds = array<i64: 256, 64>}, {pipeline_mode = #tpu.pipeline_mode<synchronous>, transform_indices = @transform_4, window_bounds = array<i64: 256, 1>}, {pipeline_mode = #tpu.pipeline_mode<synchronous>, transform_indices = @transform_5, window_bounds = array<i64: 8, 128>}, {pipeline_mode = #tpu.pipeline_mode<synchronous>, transform_indices = @transform_6, window_bounds = array<i64: 8, 1>}, {transform_indices = @transform_7, window_bounds = array<i64: 1, 1, 256>}]} {
    %c0 = arith.constant 0 : index
    %c0_0 = arith.constant 0 : index
    %c0_1 = arith.constant 0 : index
    %0 = vector.load %arg2[%c0, %c0_0, %c0_1] : memref<1x128x256xf32, #tpu.memory_space<vmem>>, vector<1x128x256xf32>
    %1 = vector.shape_cast %0 : vector<1x128x256xf32> to vector<128x256xf32>
    %c0_2 = arith.constant 0 : index
    %c0_3 = arith.constant 0 : index
    %2 = vector.load %arg4[%c0_2, %c0_3] : memref<256x128xf32, #tpu.memory_space<vmem>>, vector<256x128xf32>
    %cst = arith.constant dense<0.000000e+00> : vector<256x256xf32>
    %3 = tpu.matmul %2, %1, %cst {dimension_numbers = #tpu.dot_dimension_numbers<[1], [0], [0], [1], [0, 0, 1, 1], [], []>} : vector<256x128xf32>, vector<128x256xf32>, vector<256x256xf32> -> vector<256x256xf32>
    %c0_4 = arith.constant 0 : index
    %c0_5 = arith.constant 0 : index
    %c0_6 = arith.constant 0 : index
    %4 = vector.load %arg3[%c0_4, %c0_5, %c0_6] : memref<1x256x1xf32, #tpu.memory_space<vmem>>, vector<1x256x1xf32>
    %5 = vector.shape_cast %4 : vector<1x256x1xf32> to vector<256x1xf32>
    %6 = vector.broadcast %5 : vector<256x1xf32> to vector<256x256xf32>
    %7 = arith.addf %3, %6 : vector<256x256xf32>
    %8 = vector.extract_strided_slice %7 {offsets = [0, 0], sizes = [64, 256], strides = [1, 1]} : vector<256x256xf32> to vector<64x256xf32>
    %9 = vector.extract_strided_slice %7 {offsets = [64, 0], sizes = [64, 256], strides = [1, 1]} : vector<256x256xf32> to vector<64x256xf32>
    %10 = arith.maximumf %8, %9 : vector<64x256xf32>
    %11 = vector.extract_strided_slice %7 {offsets = [128, 0], sizes = [64, 256], strides = [1, 1]} : vector<256x256xf32> to vector<64x256xf32>
    %12 = arith.maximumf %10, %11 : vector<64x256xf32>
    %13 = vector.extract_strided_slice %7 {offsets = [192, 0], sizes = [64, 256], strides = [1, 1]} : vector<256x256xf32> to vector<64x256xf32>
    %14 = arith.maximumf %12, %13 : vector<64x256xf32>
    %c0_7 = arith.constant 0 : index
    %c0_8 = arith.constant 0 : index
    %15 = vector.load %arg5[%c0_7, %c0_8] : memref<256x64xf32, #tpu.memory_space<vmem>>, vector<256x64xf32>
    %cst_9 = arith.constant dense<0.000000e+00> : vector<256x256xf32>
    %16 = tpu.matmul %15, %14, %cst_9 {dimension_numbers = #tpu.dot_dimension_numbers<[1], [0], [0], [1], [0, 0, 1, 1], [], []>} : vector<256x64xf32>, vector<64x256xf32>, vector<256x256xf32> -> vector<256x256xf32>
    %c0_10 = arith.constant 0 : index
    %c0_11 = arith.constant 0 : index
    %17 = vector.load %arg6[%c0_10, %c0_11] : memref<256x1xf32, #tpu.memory_space<vmem>>, vector<256x1xf32>
    %18 = vector.broadcast %17 : vector<256x1xf32> to vector<256x256xf32>
    %19 = arith.addf %16, %18 : vector<256x256xf32>
    %20 = vector.extract_strided_slice %19 {offsets = [0, 0], sizes = [64, 256], strides = [1, 1]} : vector<256x256xf32> to vector<64x256xf32>
    %21 = vector.extract_strided_slice %19 {offsets = [64, 0], sizes = [64, 256], strides = [1, 1]} : vector<256x256xf32> to vector<64x256xf32>
    %22 = arith.maximumf %20, %21 : vector<64x256xf32>
    %23 = vector.extract_strided_slice %19 {offsets = [128, 0], sizes = [64, 256], strides = [1, 1]} : vector<256x256xf32> to vector<64x256xf32>
    %24 = arith.maximumf %22, %23 : vector<64x256xf32>
    %25 = vector.extract_strided_slice %19 {offsets = [192, 0], sizes = [64, 256], strides = [1, 1]} : vector<256x256xf32> to vector<64x256xf32>
    %26 = arith.maximumf %24, %25 : vector<64x256xf32>
    %c0_12 = arith.constant 0 : index
    %c0_13 = arith.constant 0 : index
    %27 = vector.load %arg10[%c0_12, %c0_13] : memref<128x256xf32, #tpu.memory_space<vmem>>, vector<64x256xf32>
    tpu.vector_store %arg10[%c0_12, %c0_13], %14 {strides = array<i32>} : memref<128x256xf32, #tpu.memory_space<vmem>>, vector<64x256xf32>,
    %c64 = arith.constant 64 : index
    %c0_14 = arith.constant 0 : index
    %28 = vector.load %arg10[%c64, %c0_14] : memref<128x256xf32, #tpu.memory_space<vmem>>, vector<64x256xf32>
    tpu.vector_store %arg10[%c64, %c0_14], %26 {strides = array<i32>} : memref<128x256xf32, #tpu.memory_space<vmem>>, vector<64x256xf32>,
    %c0_15 = arith.constant 0 : index
    %c0_16 = arith.constant 0 : index
    %29 = vector.load %arg7[%c0_15, %c0_16] : memref<8x128xf32, #tpu.memory_space<vmem>>, vector<8x128xf32>
    %c0_17 = arith.constant 0 : index
    %c0_18 = arith.constant 0 : index
    %30 = vector.load %arg10[%c0_17, %c0_18] : memref<128x256xf32, #tpu.memory_space<vmem>>, vector<128x256xf32>
    %cst_19 = arith.constant dense<0.000000e+00> : vector<8x256xf32>
    %31 = tpu.matmul %29, %30, %cst_19 {dimension_numbers = #tpu.dot_dimension_numbers<[1], [0], [0], [1], [0, 0, 1, 1], [], []>} : vector<8x128xf32>, vector<128x256xf32>, vector<8x256xf32> -> vector<8x256xf32>
    %c0_20 = arith.constant 0 : index
    %c0_21 = arith.constant 0 : index
    %32 = vector.load %arg8[%c0_20, %c0_21] : memref<8x1xf32, #tpu.memory_space<vmem>>, vector<8x1xf32>
    %33 = vector.broadcast %32 : vector<8x1xf32> to vector<8x256xf32>
    %34 = arith.addf %31, %33 : vector<8x256xf32>
    %cst_22 = arith.constant dense<0xFF800000> : vector<256xf32>
    %35 = vector.multi_reduction <maximumf>, %34, %cst_22 [0] : vector<8x256xf32> to vector<256xf32>
    %36 = vector.shape_cast %35 : vector<256xf32> to vector<1x256xf32>
    %c0_23 = arith.constant 0 : index
    %c0_24 = arith.constant 0 : index
    %c0_25 = arith.constant 0 : index
    %37 = vector.load %arg9[%c0_23, %c0_24, %c0_25] : memref<1x1x256xf32, #tpu.memory_space<vmem>>, vector<1x1x256xf32>
    %38 = vector.shape_cast %37 : vector<1x1x256xf32> to vector<1x256xf32>
    %39 = vector.shape_cast %36 : vector<1x256xf32> to vector<1x1x256xf32>
    tpu.vector_store %arg9[%c0_23, %c0_24, %c0_25], %39 {strides = array<i32>} : memref<1x1x256xf32, #tpu.memory_space<vmem>>, vector<1x1x256xf32>,
    return
  }
  func.func @transform_0(%arg0: i32, %arg1: i32) -> (i32, i32, i32) {
    %c0_i32 = arith.constant 0 : i32
    %c0_i32_0 = arith.constant 0 : i32
    return %arg0, %c0_i32, %arg1 : i32, i32, i32
  }
  func.func @transform_1(%arg0: i32, %arg1: i32) -> (i32, i32, i32) {
    %c0_i32 = arith.constant 0 : i32
    %c0_i32_0 = arith.constant 0 : i32
    %c0_i32_1 = arith.constant 0 : i32
    return %arg0, %c0_i32, %c0_i32_0 : i32, i32, i32
  }
  func.func @transform_2(%arg0: i32, %arg1: i32) -> (i32, i32) {
    %c0_i32 = arith.constant 0 : i32
    %c0_i32_0 = arith.constant 0 : i32
    %c0_i32_1 = arith.constant 0 : i32
    return %c0_i32, %c0_i32_0 : i32, i32
  }
  func.func @transform_3(%arg0: i32, %arg1: i32) -> (i32, i32) {
    %c0_i32 = arith.constant 0 : i32
    %c0_i32_0 = arith.constant 0 : i32
    %c0_i32_1 = arith.constant 0 : i32
    return %c0_i32, %c0_i32_0 : i32, i32
  }
  func.func @transform_4(%arg0: i32, %arg1: i32) -> (i32, i32) {
    %c0_i32 = arith.constant 0 : i32
    %c0_i32_0 = arith.constant 0 : i32
    %c0_i32_1 = arith.constant 0 : i32
    return %c0_i32, %c0_i32_0 : i32, i32
  }
  func.func @transform_5(%arg0: i32, %arg1: i32) -> (i32, i32) {
    %c0_i32 = arith.constant 0 : i32
    %c0_i32_0 = arith.constant 0 : i32
    %c0_i32_1 = arith.constant 0 : i32
    return %c0_i32, %c0_i32_0 : i32, i32
  }
  func.func @transform_6(%arg0: i32, %arg1: i32) -> (i32, i32) {
    %c0_i32 = arith.constant 0 : i32
    %c0_i32_0 = arith.constant 0 : i32
    %c0_i32_1 = arith.constant 0 : i32
    return %c0_i32, %c0_i32_0 : i32, i32
  }
  func.func @transform_7(%arg0: i32, %arg1: i32) -> (i32, i32, i32) {
    %c0_i32 = arith.constant 0 : i32
    %c0_i32_0 = arith.constant 0 : i32
    return %arg0, %arg1, %c0_i32 : i32, i32, i32
  }
}

</mosaic_0001>

<llo_original>
// kernel: tpu_custom_call.1
$region0: #{tpu_custom_call.1}
  #allocation0 [shape = 'u32[]', space=smem, size = 0x4, offset = 0x4, fixed_abs, tag = 'smem constant byte address 0x4 - core index']
  #allocation1 [shape = 'u32[144,128]{1,0:T(1,128)}', space=vmem, size = 0x12000, scoped, tag = 'internal scratch']
  #allocation2 [shape = 'f32[128,256]{1,0:T(8,128)}', space=vmem, size = 0x20000, scoped, tag = 'scratch operand']
  %s0 = inlined_call_operand.vmem [shape: f32[2,128,256], index: 0, kind: input, shape index: {}]
  %s1 = inlined_call_operand.vmem [shape: f32[2,256,1], index: 1, kind: input, shape index: {}]
  %s2 = inlined_call_operand.vmem [shape: f32[256,128], index: 2, kind: input, shape index: {}]
  %s3 = inlined_call_operand.vmem [shape: f32[256,64], index: 3, kind: input, shape index: {}]
  %s4 = inlined_call_operand.vmem [shape: f32[256,1], index: 4, kind: input, shape index: {}]
  %s5 = inlined_call_operand.vmem [shape: f32[8,128], index: 5, kind: input, shape index: {}]
  %s6 = inlined_call_operand.vmem [shape: f32[8,1], index: 6, kind: input, shape index: {}]
  %s7 = inlined_call_operand.hbm [shape: f32[2,1,256], index: 7, kind: output, shape index: {}]
  %s8 = sld [smem:[#allocation0]]
  $region61: #{tpu_custom_call.1} parent=0
    _
  %s10 = ssub.s32 1, %s8
  %s11 = scalar_select 0, %s10, %s8
  $region1: #{tpu_custom_call.1} parent=0
    #allocation3 [shape = 'u8[2048]{0}', space=vmem, size = 0x800, scoped, tag = 'output window, operand 0']
    #allocation4 [shape = 's32[2]{0}', space=sflag, size = 0x8, scoped, tag = 'scoped memory for tpu_custom_call.1']
    %12 = vsyncpa [#allocation4], 0
    %s13 = scalar_lea.sflag [#allocation4], 1
    %14 = vsyncpa %s13, 0
    loop: start=0, step=1, limit=4
    $region2: #{tpu_custom_call.1} parent=1 // loop_pre_header
      _
    $region3: #{tpu_custom_call.1} parent=1 // loop_header
      %s16 = sphi 0, %s20
      %p17 = scmp.ge.s32.totalorder %s16, 4
      %s23 = sphi 0, %s35
      %s24 = sphi 0, %s31
      %s25 = sphi 0, %s23
      %s26 = sphi 0, %s24
      %s27 = sphi 0, %s25
      %s28 = sphi 0, %s26
      %s40 = sphi 0, %s42
      %s43 = sphi 0, %s40
      %s44 = sphi 0, %s43
      %s60 = sphi 0, %s44
      %s66 = sphi 0, %s68
      %s69 = sphi 0, %s66
      %s70 = sphi 0, %s69
      %s86 = sphi 0, %s70
      %s90 = sphi 0, %s90
      %s92 = sphi 0, %s90
      %s93 = sphi 0, %s92
      %s107 = sphi 0, %s93
      %s111 = sphi 0, %s111
      %s113 = sphi 0, %s111
      %s114 = sphi 0, %s113
      %s128 = sphi 0, %s114
      %s132 = sphi 0, %s132
      %s134 = sphi 0, %s132
      %s135 = sphi 0, %s134
      %s149 = sphi 0, %s135
      %s153 = sphi 0, %s153
      %s155 = sphi 0, %s153
      %s156 = sphi 0, %s155
      %s170 = sphi 0, %s156
      %s174 = sphi 0, %s174
      %s176 = sphi 0, %s174
      %s177 = sphi 0, %s176
      %s191 = sphi 0, %s177
      %s199 = sphi 0, %s201
      %s202 = sphi 0, %s199
      %s203 = sphi 0, %s202
      %s219 = sphi 0, %s203
    $region4: #{tpu_custom_call.1} parent=1 // loop_header_branch
      %19 = sbr.rel (%p17) target = $region8
    $region5: #{tpu_custom_call.1} parent=1 // loop_body
      %s21 = ssub.s32 %s16, 1
      %s22 = ssub.s32 %s16, 2
      %s29 = sadd.s32 1, %s24
      %p30 = scmp.ge.s32.totalorder %s29, 1
      %s31 = scalar_select %p30, 0, %s29
      %s32 = sadd.s32 1, %s23
      %s33 = scalar_select %p30, %s32, %s23
      %p34 = scmp.ge.s32.totalorder %s33, 2
      %s35 = scalar_select %p34, 0, %s33
      %s36 = ssub.s32 %s23, %s35
      %s37 = ssub.s32 %s24, %s31
      %s38 = sor.u32 %s36, %s37
      %p39 = scmp.eq.s32.totalorder %s38, 0
      %s41 = sadd.s32 %s40, 1
      %s42 = scalar_select %p39, %s40, %s41
      %p45 = pneg %p39
      %p46 = scmp.eq.s32.totalorder %s16, 1
      %p47 = por %p45, %p46
      %p48 = scmp.ne.s32.totalorder %s40, %s43
      %p49 = scmp.eq.s32.totalorder %s16, 0
      %p50 = por %p48, %p49
      %p51 = scmp.ne.s32.totalorder %s40, %s43
      %p52 = scmp.eq.s32.totalorder %s21, 1
      %p53 = por %p51, %p52
      %p54 = scmp.ne.s32.totalorder %s43, %s44
      %p55 = scmp.eq.s32.totalorder %s21, 0
      %p56 = por %p54, %p55
      %p57 = scmp.ne.s32.totalorder %s43, %s44
      %p58 = scmp.eq.s32.totalorder %s22, 1
      %p59 = por %p57, %p58
      %p61 = scmp.ne.s32.totalorder %s44, %s60
      %p62 = scmp.eq.s32.totalorder %s22, 0
      %p63 = por %p61, %p62
      %s64 = ssub.s32 %s23, %s35
      %p65 = scmp.eq.s32.totalorder %s64, 0
      %s67 = sadd.s32 %s66, 1
      %s68 = scalar_select %p65, %s66, %s67
      %p71 = pneg %p65
      %p72 = scmp.eq.s32.totalorder %s16, 1
      %p73 = por %p71, %p72
      %p74 = scmp.ne.s32.totalorder %s66, %s69
      %p75 = scmp.eq.s32.totalorder %s16, 0
      %p76 = por %p74, %p75
      %p77 = scmp.ne.s32.totalorder %s66, %s69
      %p78 = scmp.eq.s32.totalorder %s21, 1
      %p79 = por %p77, %p78
      %p80 = scmp.ne.s32.totalorder %s69, %s70
      %p81 = scmp.eq.s32.totalorder %s21, 0
      %p82 = por %p80, %p81
      %p83 = scmp.ne.s32.totalorder %s69, %s70
      %p84 = scmp.eq.s32.totalorder %s22, 1
      %p85 = por %p83, %p84
      %p87 = scmp.ne.s32.totalorder %s70, %s86
      %p88 = scmp.eq.s32.totalorder %s22, 0
      %p89 = por %p87, %p88
      %s91 = sadd.s32 %s90, 1
      %p94 = scmp.eq.s32.totalorder %s16, 1
      %p95 = scmp.ne.s32.totalorder %s90, %s92
      %p96 = scmp.eq.s32.totalorder %s16, 0
      %p97 = por %p95, %p96
      %p98 = scmp.ne.s32.totalorder %s90, %s92
      %p99 = scmp.eq.s32.totalorder %s21, 1
      %p100 = por %p98, %p99
      %p101 = scmp.ne.s32.totalorder %s92, %s93
      %p102 = scmp.eq.s32.totalorder %s21, 0
      %p103 = por %p101, %p102
      %p104 = scmp.ne.s32.totalorder %s92, %s93
      %p105 = scmp.eq.s32.totalorder %s22, 1
      %p106 = por %p104, %p105
      %p108 = scmp.ne.s32.totalorder %s93, %s107
      %p109 = scmp.eq.s32.totalorder %s22, 0
      %p110 = por %p108, %p109
      %s112 = sadd.s32 %s111, 1
      %p115 = scmp.eq.s32.totalorder %s16, 1
      %p116 = scmp.ne.s32.totalorder %s111, %s113
      %p117 = scmp.eq.s32.totalorder %s16, 0
      %p118 = por %p116, %p117
      %p119 = scmp.ne.s32.totalorder %s111, %s113
      %p120 = scmp.eq.s32.totalorder %s21, 1
      %p121 = por %p119, %p120
      %p122 = scmp.ne.s32.totalorder %s113, %s114
      %p123 = scmp.eq.s32.totalorder %s21, 0
      %p124 = por %p122, %p123
      %p125 = scmp.ne.s32.totalorder %s113, %s114
      %p126 = scmp.eq.s32.totalorder %s22, 1
      %p127 = por %p125, %p126
      %p129 = scmp.ne.s32.totalorder %s114, %s128
      %p130 = scmp.eq.s32.totalorder %s22, 0
      %p131 = por %p129, %p130
      %s133 = sadd.s32 %s132, 1
      %p136 = scmp.eq.s32.totalorder %s16, 1
      %p137 = scmp.ne.s32.totalorder %s132, %s134
      %p138 = scmp.eq.s32.totalorder %s16, 0
      %p139 = por %p137, %p138
      %p140 = scmp.ne.s32.totalorder %s132, %s134
      %p141 = scmp.eq.s32.totalorder %s21, 1
      %p142 = por %p140, %p141
      %p143 = scmp.ne.s32.totalorder %s134, %s135
      %p144 = scmp.eq.s32.totalorder %s21, 0
      %p145 = por %p143, %p144
      %p146 = scmp.ne.s32.totalorder %s134, %s135
      %p147 = scmp.eq.s32.totalorder %s22, 1
      %p148 = por %p146, %p147
      %p150 = scmp.ne.s32.totalorder %s135, %s149
      %p151 = scmp.eq.s32.totalorder %s22, 0
      %p152 = por %p150, %p151
      %s154 = sadd.s32 %s153, 1
      %p157 = scmp.eq.s32.totalorder %s16, 1
      %p158 = scmp.ne.s32.totalorder %s153, %s155
      %p159 = scmp.eq.s32.totalorder %s16, 0
      %p160 = por %p158, %p159
      %p161 = scmp.ne.s32.totalorder %s153, %s155
      %p162 = scmp.eq.s32.totalorder %s21, 1
      %p163 = por %p161, %p162
      %p164 = scmp.ne.s32.totalorder %s155, %s156
      %p165 = scmp.eq.s32.totalorder %s21, 0
      %p166 = por %p164, %p165
      %p167 = scmp.ne.s32.totalorder %s155, %s156
      %p168 = scmp.eq.s32.totalorder %s22, 1
      %p169 = por %p167, %p168
      %p171 = scmp.ne.s32.totalorder %s156, %s170
      %p172 = scmp.eq.s32.totalorder %s22, 0
      %p173 = por %p171, %p172
      %s175 = sadd.s32 %s174, 1
      %p178 = scmp.eq.s32.totalorder %s16, 1
      %p179 = scmp.ne.s32.totalorder %s174, %s176
      %p180 = scmp.eq.s32.totalorder %s16, 0
      %p181 = por %p179, %p180
      %p182 = scmp.ne.s32.totalorder %s174, %s176
      %p183 = scmp.eq.s32.totalorder %s21, 1
      %p184 = por %p182, %p183
      %p185 = scmp.ne.s32.totalorder %s176, %s177
      %p186 = scmp.eq.s32.totalorder %s21, 0
      %p187 = por %p185, %p186
      %p188 = scmp.ne.s32.totalorder %s176, %s177
      %p189 = scmp.eq.s32.totalorder %s22, 1
      %p190 = por %p188, %p189
      %p192 = scmp.ne.s32.totalorder %s177, %s191
      %p193 = scmp.eq.s32.totalorder %s22, 0
      %p194 = por %p192, %p193
      %s195 = ssub.s32 %s23, %s35
      %s196 = ssub.s32 %s24, %s31
      %s197 = sor.u32 %s195, %s196
      %p198 = scmp.eq.s32.totalorder %s197, 0
      %s200 = sadd.s32 %s199, 1
      %s201 = scalar_select %p198, %s199, %s200
      %p204 = pneg %p198
      %p205 = scmp.eq.s32.totalorder %s16, 1
      %p206 = por %p204, %p205
      %p207 = scmp.ne.s32.totalorder %s199, %s202
      %p208 = scmp.eq.s32.totalorder %s16, 0
      %p209 = por %p207, %p208
      %p210 = scmp.ne.s32.totalorder %s199, %s202
      %p211 = scmp.eq.s32.totalorder %s21, 1
      %p212 = por %p210, %p211
      %p213 = scmp.ne.s32.totalorder %s202, %s203
      %p214 = scmp.eq.s32.totalorder %s21, 0
      %p215 = por %p213, %p214
      %p216 = scmp.ne.s32.totalorder %s202, %s203
      %p217 = scmp.eq.s32.totalorder %s22, 1
      %p218 = por %p216, %p217
      %p220 = scmp.ne.s32.totalorder %s203, %s219
      %p221 = scmp.eq.s32.totalorder %s22, 0
      %p222 = por %p220, %p221
      %p223 = scmp.le.s32.totalorder 1, %s16
      %p224 = scmp.lt.s32.totalorder %s16, 3
      %p225 = pnand %p223, %p224
      %p226 = pneg %p225
      // Predicated region
      $region9: #{tpu_custom_call.1} parent=5 // pred_check
        _
      $region10: #{tpu_custom_call.1} parent=5 // pred_check_branch
        %228 = sbr.rel (%p225) target = $region12
      $region11: #{tpu_custom_call.1} parent=5 // pred_region
        %s229 = ssub.s32 %s16, 1
        // Predicated region
        $region13: #{tpu_custom_call.1} parent=11 // pred_check
          %p230 = pneg %p103
        $region14: #{tpu_custom_call.1} parent=11 // pred_check_branch
          %232 = sbr.rel (%p230) target = $region16
        $region15: #{tpu_custom_call.1} parent=11 // pred_region
          _
        $region16: #{tpu_custom_call.1} parent=11 // pred_fallthru
          _
        // Predicated region
        $region17: #{tpu_custom_call.1} parent=11 // pred_check
          %p233 = pneg %p124
        $region18: #{tpu_custom_call.1} parent=11 // pred_check_branch
          %235 = sbr.rel (%p233) target = $region20
        $region19: #{tpu_custom_call.1} parent=11 // pred_region
          _
        $region20: #{tpu_custom_call.1} parent=11 // pred_fallthru
          _
        // Predicated region
        $region21: #{tpu_custom_call.1} parent=11 // pred_check
          %p236 = pneg %p145
        $region22: #{tpu_custom_call.1} parent=11 // pred_check_branch
          %238 = sbr.rel (%p236) target = $region24
        $region23: #{tpu_custom_call.1} parent=11 // pred_region
          _
        $region24: #{tpu_custom_call.1} parent=11 // pred_fallthru
          _
        // Predicated region
        $region25: #{tpu_custom_call.1} parent=11 // pred_check
          %p239 = pneg %p166
        $region26: #{tpu_custom_call.1} parent=11 // pred_check_branch
          %241 = sbr.rel (%p239) target = $region28
        $region27: #{tpu_custom_call.1} parent=11 // pred_region
          _
        $region28: #{tpu_custom_call.1} parent=11 // pred_fallthru
          _
        // Predicated region
        $region29: #{tpu_custom_call.1} parent=11 // pred_check
          %p242 = pneg %p187
        $region30: #{tpu_custom_call.1} parent=11 // pred_check_branch
          %244 = sbr.rel (%p242) target = $region32
        $region31: #{tpu_custom_call.1} parent=11 // pred_region
          _
        $region32: #{tpu_custom_call.1} parent=11 // pred_fallthru
          _
      $region12: #{tpu_custom_call.1} parent=5 // pred_fallthru
        _
      %p245 = scmp.lt.s32.totalorder %s16, 2
      // Predicated region
      $region33: #{tpu_custom_call.1} parent=5 // pred_check
        %p246 = pneg %p245
      $region34: #{tpu_custom_call.1} parent=5 // pred_check_branch
        %248 = sbr.rel (%p246) target = $region36
      $region35: #{tpu_custom_call.1} parent=5 // pred_region
        // Predicated region
        $region37: #{tpu_custom_call.1} parent=35 // pred_check
          %p249 = pneg %p50
        $region38: #{tpu_custom_call.1} parent=35 // pred_check_branch
          %251 = sbr.rel (%p249) target = $region40
        $region39: #{tpu_custom_call.1} parent=35 // pred_region
          %s252 = smul.u32 2, %s24
          %p253 = scmp.lt.s32.totalorder %s23, 1
          %s254 = scalar_select %p253, %s23, 1
          %p255 = scmp.lt.s32.totalorder %s252, 1
          %s256 = scalar_select %p255, %s252, 1
          %s257 = smul.addr %s254, 32
          %s258 = sadd.s32 %s256, %s257
          %s259 = smul.addr %s258, 8
          %s260 = scalar_lea.vmem %s0, %s259
          %s261 = smul.u32 2, %s24
        $region40: #{tpu_custom_call.1} parent=35 // pred_fallthru
          _
        // Predicated region
        $region41: #{tpu_custom_call.1} parent=35 // pred_check
          %p262 = pneg %p76
        $region42: #{tpu_custom_call.1} parent=35 // pred_check_branch
          %264 = sbr.rel (%p262) target = $region44
        $region43: #{tpu_custom_call.1} parent=35 // pred_region
          %p265 = scmp.lt.s32.totalorder %s23, 1
          %s266 = scalar_select %p265, %s23, 1
          %s267 = smul.addr %s266, 32
          %s268 = smul.addr %s267, 8
          %s269 = scalar_lea.vmem %s1, %s268
        $region44: #{tpu_custom_call.1} parent=35 // pred_fallthru
          _
      $region36: #{tpu_custom_call.1} parent=5 // pred_fallthru
        _
      %p270 = scmp.le.s32.totalorder 1, %s16
      %p271 = scmp.lt.s32.totalorder %s16, 3
      %p272 = pnand %p270, %p271
      %p273 = pneg %p272
      // Predicated region
      $region45: #{tpu_custom_call.1} parent=5 // pred_check
        _
      $region46: #{tpu_custom_call.1} parent=5 // pred_check_branch
        %275 = sbr.rel (%p272) target = $region48
      $region47: #{tpu_custom_call.1} parent=5 // pred_region
        %s276 = ssub.s32 %s16, 1
        %s277 = smul.u32 2, %s26
        %p278 = scmp.lt.s32.totalorder %s25, 1
        %s279 = scalar_select %p278, %s25, 1
        %p280 = scmp.lt.s32.totalorder %s277, 1
        %s281 = scalar_select %p280, %s277, 1
        %s282 = smul.addr %s279, 32
        %s283 = sadd.s32 %s281, %s282
        %s284 = smul.addr %s283, 8
        %s285 = scalar_lea.vmem %s0, %s284
        %p286 = pneg %p56
        %p287 = pneg %p53
        %p288 = scmp.lt.s32.totalorder %s25, 1
        %s289 = scalar_select %p288, %s25, 1
        %s290 = smul.addr %s289, 32
        %s291 = smul.addr %s290, 8
        %s292 = scalar_lea.vmem %s1, %s291
        %p293 = pneg %p82
        %p294 = pneg %p79
        %p295 = pneg %p103
        %p296 = pneg %p100
        %p297 = pneg %p124
        %p298 = pneg %p121
        %p299 = pneg %p145
        %p300 = pneg %p142
        %p301 = pneg %p166
        %p302 = pneg %p163
        %p303 = pneg %p187
        %p304 = pneg %p184
        %p305 = pneg %p215
        %p306 = pneg %p212
        %s307 = sand.u32 %s202, 1
        %s308 = scalar_lea.sflag [#allocation4], %s307
        %s309 = sand.u32 %s202, 1
        %s310 = smul.addr %s309, 2
        %s311 = scalar_lea.vmem [#allocation3], %s310
        %s312 = smul.u32 2, %s26
        %p313 = scmp.lt.s32.totalorder %s25, 1
        %s314 = scalar_select %p313, %s25, 1
        %p315 = scmp.lt.s32.totalorder %s312, 1
        %s316 = scalar_select %p315, %s312, 1
        %s317 = smul.addr %s314, 32
        %s318 = sadd.s32 %s316, %s317
        %s319 = smul.addr %s318, 8
        %s320 = scalar_lea.vmem %s0, %s319
        %s321 = smul.u32 2, %s26
        %p322 = scmp.lt.s32.totalorder %s25, 1
        %s323 = scalar_select %p322, %s25, 1
        %s324 = smul.addr %s323, 32
        %s325 = smul.addr %s324, 8
        %s326 = scalar_lea.vmem %s1, %s325
        %v327 = vld [vmem:[%s320] sm:$0xff]
        %v328 = vld [vmem:[%s320 + $0x8] sm:$0xff]
        %v329 = vld [vmem:[%s320 + $0x10] sm:$0xff]
        %v330 = vld [vmem:[%s320 + $0x18] sm:$0xff]
        %v331 = vld [vmem:[%s320 + $0x20] sm:$0xff]
        %v332 = vld [vmem:[%s320 + $0x28] sm:$0xff]
        %v333 = vld [vmem:[%s320 + $0x30] sm:$0xff]
        %v334 = vld [vmem:[%s320 + $0x38] sm:$0xff]
        %v335 = vld [vmem:[%s320 + $0x40] sm:$0xff]
        %v336 = vld [vmem:[%s320 + $0x48] sm:$0xff]
        %v337 = vld [vmem:[%s320 + $0x50] sm:$0xff]
        %v338 = vld [vmem:[%s320 + $0x58] sm:$0xff]
        %v339 = vld [vmem:[%s320 + $0x60] sm:$0xff]
        %v340 = vld [vmem:[%s320 + $0x68] sm:$0xff]
        %v341 = vld [vmem:[%s320 + $0x70] sm:$0xff]
        %v342 = vld [vmem:[%s320 + $0x78] sm:$0xff]
        %v343 = vld [vmem:[%s320 + $0x80] sm:$0xff]
        %v344 = vld [vmem:[%s320 + $0x88] sm:$0xff]
        %v345 = vld [vmem:[%s320 + $0x90] sm:$0xff]
        %v346 = vld [vmem:[%s320 + $0x98] sm:$0xff]
        %v347 = vld [vmem:[%s320 + $0xa0] sm:$0xff]
        %v348 = vld [vmem:[%s320 + $0xa8] sm:$0xff]
        %v349 = vld [vmem:[%s320 + $0xb0] sm:$0xff]
        %v350 = vld [vmem:[%s320 + $0xb8] sm:$0xff]
        %v351 = vld [vmem:[%s320 + $0xc0] sm:$0xff]
        %v352 = vld [vmem:[%s320 + $0xc8] sm:$0xff]
        %v353 = vld [vmem:[%s320 + $0xd0] sm:$0xff]
        %v354 = vld [vmem:[%s320 + $0xd8] sm:$0xff]
        %v355 = vld [vmem:[%s320 + $0xe0] sm:$0xff]
        %v356 = vld [vmem:[%s320 + $0xe8] sm:$0xff]
        %v357 = vld [vmem:[%s320 + $0xf0] sm:$0xff]
        %v358 = vld [vmem:[%s320 + $0xf8] sm:$0xff]
        %v359 = vld [vmem:[%s2] sm:$0xff]
        %v360 = vld [vmem:[%s2 + $0x8] sm:$0xff]
        %v361 = vld [vmem:[%s2 + $0x10] sm:$0xff]
        %v362 = vld [vmem:[%s2 + $0x18] sm:$0xff]
        %v363 = vld [vmem:[%s2 + $0x20] sm:$0xff]
        %v364 = vld [vmem:[%s2 + $0x28] sm:$0xff]
        %v365 = vld [vmem:[%s2 + $0x30] sm:$0xff]
        %v366 = vld [vmem:[%s2 + $0x38] sm:$0xff]
        %v367 = vld [vmem:[%s2 + $0x40] sm:$0xff]
        %v368 = vld [vmem:[%s2 + $0x48] sm:$0xff]
        %v369 = vld [vmem:[%s2 + $0x50] sm:$0xff]
        %v370 = vld [vmem:[%s2 + $0x58] sm:$0xff]
        %v371 = vld [vmem:[%s2 + $0x60] sm:$0xff]
        %v372 = vld [vmem:[%s2 + $0x68] sm:$0xff]
        %v373 = vld [vmem:[%s2 + $0x70] sm:$0xff]
        %v374 = vld [vmem:[%s2 + $0x78] sm:$0xff]
        %v375 = vld [vmem:[%s2 + $0x80] sm:$0xff]
        %v376 = vld [vmem:[%s2 + $0x88] sm:$0xff]
        %v377 = vld [vmem:[%s2 + $0x90] sm:$0xff]
        %v378 = vld [vmem:[%s2 + $0x98] sm:$0xff]
        %v379 = vld [vmem:[%s2 + $0xa0] sm:$0xff]
        %v380 = vld [vmem:[%s2 + $0xa8] sm:$0xff]
        %v381 = vld [vmem:[%s2 + $0xb0] sm:$0xff]
        %v382 = vld [vmem:[%s2 + $0xb8] sm:$0xff]
        %v383 = vld [vmem:[%s2 + $0xc0] sm:$0xff]
        %v384 = vld [vmem:[%s2 + $0xc8] sm:$0xff]
        %v385 = vld [vmem:[%s2 + $0xd0] sm:$0xff]
        %v386 = vld [vmem:[%s2 + $0xd8] sm:$0xff]
        %v387 = vld [vmem:[%s2 + $0xe0] sm:$0xff]
        %v388 = vld [vmem:[%s2 + $0xe8] sm:$0xff]
        %v389 = vld [vmem:[%s2 + $0xf0] sm:$0xff]
        %v390 = vld [vmem:[%s2 + $0xf8] sm:$0xff]
        %v391 = vld [vmem:[%s326] sm:$0xff]
        %v392 = vld [vmem:[%s326 + $0x8] sm:$0xff]
        %v393 = vld [vmem:[%s326 + $0x10] sm:$0xff]
        %v394 = vld [vmem:[%s326 + $0x18] sm:$0xff]
        %v395 = vld [vmem:[%s326 + $0x20] sm:$0xff]
        %v396 = vld [vmem:[%s326 + $0x28] sm:$0xff]
        %v397 = vld [vmem:[%s326 + $0x30] sm:$0xff]
        %v398 = vld [vmem:[%s326 + $0x38] sm:$0xff]
        %v399 = vld [vmem:[%s326 + $0x40] sm:$0xff]
        %v400 = vld [vmem:[%s326 + $0x48] sm:$0xff]
        %v401 = vld [vmem:[%s326 + $0x50] sm:$0xff]
        %v402 = vld [vmem:[%s326 + $0x58] sm:$0xff]
        %v403 = vld [vmem:[%s326 + $0x60] sm:$0xff]
        %v404 = vld [vmem:[%s326 + $0x68] sm:$0xff]
        %v405 = vld [vmem:[%s326 + $0x70] sm:$0xff]
        %v406 = vld [vmem:[%s326 + $0x78] sm:$0xff]
        %v407 = vld [vmem:[%s326 + $0x80] sm:$0xff]
        %v408 = vld [vmem:[%s326 + $0x88] sm:$0xff]
        %v409 = vld [vmem:[%s326 + $0x90] sm:$0xff]
        %v410 = vld [vmem:[%s326 + $0x98] sm:$0xff]
        %v411 = vld [vmem:[%s326 + $0xa0] sm:$0xff]
        %v412 = vld [vmem:[%s326 + $0xa8] sm:$0xff]
        %v413 = vld [vmem:[%s326 + $0xb0] sm:$0xff]
        %v414 = vld [vmem:[%s326 + $0xb8] sm:$0xff]
        %v415 = vld [vmem:[%s326 + $0xc0] sm:$0xff]
        %v416 = vld [vmem:[%s326 + $0xc8] sm:$0xff]
        %v417 = vld [vmem:[%s326 + $0xd0] sm:$0xff]
        %v418 = vld [vmem:[%s326 + $0xd8] sm:$0xff]
        %v419 = vld [vmem:[%s326 + $0xe0] sm:$0xff]
        %v420 = vld [vmem:[%s326 + $0xe8] sm:$0xff]
        %v421 = vld [vmem:[%s326 + $0xf0] sm:$0xff]
        %v422 = vld [vmem:[%s326 + $0xf8] sm:$0xff]
        %424 = vset.pattern.permute.xlu0 0
        %425 = vperm.xlu0 %424, %v391
        %v426 = vpop.permute.xlu0 %425
        %429 = vset.pattern.permute.xlu0 0
        %430 = vperm.xlu0 %429, %v392
        %v431 = vpop.permute.xlu0 %430
        %434 = vset.pattern.permute.xlu0 0
        %435 = vperm.xlu0 %434, %v393
        %v436 = vpop.permute.xlu0 %435
        %439 = vset.pattern.permute.xlu0 0
        %440 = vperm.xlu0 %439, %v394
        %v441 = vpop.permute.xlu0 %440
        %444 = vset.pattern.permute.xlu0 0
        %445 = vperm.xlu0 %444, %v395
        %v446 = vpop.permute.xlu0 %445
        %449 = vset.pattern.permute.xlu0 0
        %450 = vperm.xlu0 %449, %v396
        %v451 = vpop.permute.xlu0 %450
        %454 = vset.pattern.permute.xlu0 0
        %455 = vperm.xlu0 %454, %v397
        %v456 = vpop.permute.xlu0 %455
        %459 = vset.pattern.permute.xlu0 0
        %460 = vperm.xlu0 %459, %v398
        %v461 = vpop.permute.xlu0 %460
        %464 = vset.pattern.permute.xlu0 0
        %465 = vperm.xlu0 %464, %v399
        %v466 = vpop.permute.xlu0 %465
        %469 = vset.pattern.permute.xlu0 0
        %470 = vperm.xlu0 %469, %v400
        %v471 = vpop.permute.xlu0 %470
        %474 = vset.pattern.permute.xlu0 0
        %475 = vperm.xlu0 %474, %v401
        %v476 = vpop.permute.xlu0 %475
        %479 = vset.pattern.permute.xlu0 0
        %480 = vperm.xlu0 %479, %v402
        %v481 = vpop.permute.xlu0 %480
        %484 = vset.pattern.permute.xlu0 0
        %485 = vperm.xlu0 %484, %v403
        %v486 = vpop.permute.xlu0 %485
        %489 = vset.pattern.permute.xlu0 0
        %490 = vperm.xlu0 %489, %v404
        %v491 = vpop.permute.xlu0 %490
        %494 = vset.pattern.permute.xlu0 0
        %495 = vperm.xlu0 %494, %v405
        %v496 = vpop.permute.xlu0 %495
        %499 = vset.pattern.permute.xlu0 0
        %500 = vperm.xlu0 %499, %v406
        %v501 = vpop.permute.xlu0 %500
        %504 = vset.pattern.permute.xlu0 0
        %505 = vperm.xlu0 %504, %v407
        %v506 = vpop.permute.xlu0 %505
        %509 = vset.pattern.permute.xlu0 0
        %510 = vperm.xlu0 %509, %v408
        %v511 = vpop.permute.xlu0 %510
        %514 = vset.pattern.permute.xlu0 0
        %515 = vperm.xlu0 %514, %v409
        %v516 = vpop.permute.xlu0 %515
        %519 = vset.pattern.permute.xlu0 0
        %520 = vperm.xlu0 %519, %v410
        %v521 = vpop.permute.xlu0 %520
        %524 = vset.pattern.permute.xlu0 0
        %525 = vperm.xlu0 %524, %v411
        %v526 = vpop.permute.xlu0 %525
        %529 = vset.pattern.permute.xlu0 0
        %530 = vperm.xlu0 %529, %v412
        %v531 = vpop.permute.xlu0 %530
        %534 = vset.pattern.permute.xlu0 0
        %535 = vperm.xlu0 %534, %v413
        %v536 = vpop.permute.xlu0 %535
        %539 = vset.pattern.permute.xlu0 0
        %540 = vperm.xlu0 %539, %v414
        %v541 = vpop.permute.xlu0 %540
        %544 = vset.pattern.permute.xlu0 0
        %545 = vperm.xlu0 %544, %v415
        %v546 = vpop.permute.xlu0 %545
        %549 = vset.pattern.permute.xlu0 0
        %550 = vperm.xlu0 %549, %v416
        %v551 = vpop.permute.xlu0 %550
        %554 = vset.pattern.permute.xlu0 0
        %555 = vperm.xlu0 %554, %v417
        %v556 = vpop.permute.xlu0 %555
        %559 = vset.pattern.permute.xlu0 0
        %560 = vperm.xlu0 %559, %v418
        %v561 = vpop.permute.xlu0 %560
        %564 = vset.pattern.permute.xlu0 0
        %565 = vperm.xlu0 %564, %v419
        %v566 = vpop.permute.xlu0 %565
        %569 = vset.pattern.permute.xlu0 0
        %570 = vperm.xlu0 %569, %v420
        %v571 = vpop.permute.xlu0 %570
        %574 = vset.pattern.permute.xlu0 0
        %575 = vperm.xlu0 %574, %v421
        %v576 = vpop.permute.xlu0 %575
        %579 = vset.pattern.permute.xlu0 0
        %580 = vperm.xlu0 %579, %v422
        %v581 = vpop.permute.xlu0 %580
        %583 = vmatprep.subr.mxu0 %v328
        %584 = vmatpush1.msra.mxu0 %v327
        %585 = vmatprep.subr.mxu0 %v330
        %586 = vmatpush1.msra.mxu0 %v329
        %587 = vmatprep.subr.mxu0 %v332
        %588 = vmatpush1.msra.mxu0 %v331
        %589 = vmatprep.subr.mxu0 %v334
        %590 = vmatpush1.msra.mxu0 %v333
        %591 = vmatprep.subr.mxu0 %v336
        %592 = vmatpush1.msra.mxu0 %v335
        %593 = vmatprep.subr.mxu0 %v338
        %594 = vmatpush1.msra.mxu0 %v337
        %595 = vmatprep.subr.mxu0 %v340
        %596 = vmatpush1.msra.mxu0 %v339
        %597 = vmatprep.subr.mxu0 %v342
        %598 = vmatpush1.msra.mxu0 %v341
        %599 = vmatprep.subr.mxu0 %v344
        %600 = vmatpush1.msra.mxu0 %v343
        %601 = vmatprep.subr.mxu0 %v346
        %602 = vmatpush1.msra.mxu0 %v345
        %603 = vmatprep.subr.mxu0 %v348
        %604 = vmatpush1.msra.mxu0 %v347
        %605 = vmatprep.subr.mxu0 %v350
        %606 = vmatpush1.msra.mxu0 %v349
        %607 = vmatprep.subr.mxu0 %v352
        %608 = vmatpush1.msra.mxu0 %v351
        %609 = vmatprep.subr.mxu0 %v354
        %610 = vmatpush1.msra.mxu0 %v353
        %611 = vmatprep.subr.mxu0 %v356
        %612 = vmatpush1.msra.mxu0 %v355
        %613 = vmatprep.subr.mxu0 %v358
        %614 = vmatpush1.msra.mxu0 %v357
        %615 = vmatprep.subr.mxu0 0.0
        %616 = vmatpush1.msra.mxu0 0.0
        %617 = vmatprep.subr.mxu0 0.0
        %618 = vmatpush1.msra.mxu0 0.0
        %619 = vmatprep.subr.mxu0 0.0
        %620 = vmatpush1.msra.mxu0 0.0
        %621 = vmatprep.subr.mxu0 0.0
        %622 = vmatpush1.msra.mxu0 0.0
        %623 = vmatprep.subr.mxu0 0.0
        %624 = vmatpush1.msra.mxu0 0.0
        %625 = vmatprep.subr.mxu0 0.0
        %626 = vmatpush1.msra.mxu0 0.0
        %627 = vmatprep.subr.mxu0 0.0
        %628 = vmatpush1.msra.mxu0 0.0
        %629 = vmatprep.subr.mxu0 0.0
        %630 = vmatpush1.msra.mxu0 0.0
        %631 = vmatprep.subr.mxu0 0.0
        %632 = vmatpush1.msra.mxu0 0.0
        %633 = vmatprep.subr.mxu0 0.0
        %634 = vmatpush1.msra.mxu0 0.0
        %635 = vmatprep.subr.mxu0 0.0
        %636 = vmatpush1.msra.mxu0 0.0
        %637 = vmatprep.subr.mxu0 0.0
        %638 = vmatpush1.msra.mxu0 0.0
        %639 = vmatprep.subr.mxu0 0.0
        %640 = vmatpush1.msra.mxu0 0.0
        %641 = vmatprep.subr.mxu0 0.0
        %642 = vmatpush1.msra.mxu0 0.0
        %643 = vmatprep.subr.mxu0 0.0
        %644 = vmatpush1.msra.mxu0 0.0
        %645 = vmatprep.subr.mxu0 0.0
        %646 = vmatpush1.msra.mxu0 0.0
        %647 = vmatprep.mubr.f32.mxu0 0.0
        %648 = vmatmul.mubr.f32.gmra.mrb[0].mxu0 %v359
        %v649 = vpop.f32.mrb[0].mxu0
        %v650 = vadd.f32 %v426, %v649
        %v651 = vpop.f32.mrb[0].mxu0
        %v652 = vadd.f32 %v426, %v651
        %653 = vmatprep.mubr.f32.mxu0 0.0
        %654 = vmatmul.mubr.f32.gmra.mrb[0].mxu0 %v360
        %v655 = vpop.f32.mrb[0].mxu0
        %v656 = vadd.f32 %v431, %v655
        %v657 = vpop.f32.mrb[0].mxu0
        %v658 = vadd.f32 %v431, %v657
        %659 = vmatprep.mubr.f32.mxu0 0.0
        %660 = vmatmul.mubr.f32.gmra.mrb[0].mxu0 %v361
        %v661 = vpop.f32.mrb[0].mxu0
        %v662 = vadd.f32 %v436, %v661
        %v663 = vpop.f32.mrb[0].mxu0
        %v664 = vadd.f32 %v436, %v663
        %665 = vmatprep.mubr.f32.mxu0 0.0
        %666 = vmatmul.mubr.f32.gmra.mrb[0].mxu0 %v362
        %v667 = vpop.f32.mrb[0].mxu0
        %v668 = vadd.f32 %v441, %v667
        %v669 = vpop.f32.mrb[0].mxu0
        %v670 = vadd.f32 %v441, %v669
        %671 = vmatprep.mubr.f32.mxu0 0.0
        %672 = vmatmul.mubr.f32.gmra.mrb[0].mxu0 %v363
        %v673 = vpop.f32.mrb[0].mxu0
        %v674 = vadd.f32 %v446, %v673
        %v675 = vpop.f32.mrb[0].mxu0
        %v676 = vadd.f32 %v446, %v675
        %677 = vmatprep.mubr.f32.mxu0 0.0
        %678 = vmatmul.mubr.f32.gmra.mrb[0].mxu0 %v364
        %v679 = vpop.f32.mrb[0].mxu0
        %v680 = vadd.f32 %v451, %v679
        %v681 = vpop.f32.mrb[0].mxu0
        %v682 = vadd.f32 %v451, %v681
        %683 = vmatprep.mubr.f32.mxu0 0.0
        %684 = vmatmul.mubr.f32.gmra.mrb[0].mxu0 %v365
        %v685 = vpop.f32.mrb[0].mxu0
        %v686 = vadd.f32 %v456, %v685
        %v687 = vpop.f32.mrb[0].mxu0
        %v688 = vadd.f32 %v456, %v687
        %689 = vmatprep.mubr.f32.mxu0 0.0
        %690 = vmatmul.mubr.f32.gmra.mrb[0].mxu0 %v366
        %v691 = vpop.f32.mrb[0].mxu0
        %v692 = vadd.f32 %v461, %v691
        %v693 = vpop.f32.mrb[0].mxu0
        %v694 = vadd.f32 %v461, %v693
        %695 = vmatprep.mubr.f32.mxu0 0.0
        %696 = vmatmul.mubr.f32.gmra.mrb[0].mxu0 %v367
        %v697 = vpop.f32.mrb[0].mxu0
        %v698 = vadd.f32 %v466, %v697
        %v699 = vpop.f32.mrb[0].mxu0
        %v700 = vadd.f32 %v466, %v699
        %701 = vmatprep.mubr.f32.mxu0 0.0
        %702 = vmatmul.mubr.f32.gmra.mrb[0].mxu0 %v368
        %v703 = vpop.f32.mrb[0].mxu0
        %v704 = vadd.f32 %v471, %v703
        %v705 = vpop.f32.mrb[0].mxu0
        %v706 = vadd.f32 %v471, %v705
        %707 = vmatprep.mubr.f32.mxu0 0.0
        %708 = vmatmul.mubr.f32.gmra.mrb[0].mxu0 %v369
        %v709 = vpop.f32.mrb[0].mxu0
        %v710 = vadd.f32 %v476, %v709
        %v711 = vpop.f32.mrb[0].mxu0
        %v712 = vadd.f32 %v476, %v711
        %713 = vmatprep.mubr.f32.mxu0 0.0
        %714 = vmatmul.mubr.f32.gmra.mrb[0].mxu0 %v370
        %v715 = vpop.f32.mrb[0].mxu0
        %v716 = vadd.f32 %v481, %v715
        %v717 = vpop.f32.mrb[0].mxu0
        %v718 = vadd.f32 %v481, %v717
        %719 = vmatprep.mubr.f32.mxu0 0.0
        %720 = vmatmul.mubr.f32.gmra.mrb[0].mxu0 %v371
        %v721 = vpop.f32.mrb[0].mxu0
        %v722 = vadd.f32 %v486, %v721
        %v723 = vpop.f32.mrb[0].mxu0
        %v724 = vadd.f32 %v486, %v723
        %725 = vmatprep.mubr.f32.mxu0 0.0
        %726 = vmatmul.mubr.f32.gmra.mrb[0].mxu0 %v372
        %v727 = vpop.f32.mrb[0].mxu0
        %v728 = vadd.f32 %v491, %v727
        %v729 = vpop.f32.mrb[0].mxu0
        %v730 = vadd.f32 %v491, %v729
        %731 = vmatprep.mubr.f32.mxu0 0.0
        %732 = vmatmul.mubr.f32.gmra.mrb[0].mxu0 %v373
        %v733 = vpop.f32.mrb[0].mxu0
        %v734 = vadd.f32 %v496, %v733
        %v735 = vpop.f32.mrb[0].mxu0
        %v736 = vadd.f32 %v496, %v735
        %737 = vmatprep.mubr.f32.mxu0 0.0
        %738 = vmatmul.mubr.f32.gmra.mrb[0].mxu0 %v374
        %v739 = vpop.f32.mrb[0].mxu0
        %v740 = vadd.f32 %v501, %v739
        %v741 = vpop.f32.mrb[0].mxu0
        %v742 = vadd.f32 %v501, %v741
        %743 = vmatprep.mubr.f32.mxu0 0.0
        %744 = vmatmul.mubr.f32.gmra.mrb[0].mxu0 %v375
        %v745 = vpop.f32.mrb[0].mxu0
        %v746 = vadd.f32 %v506, %v745
        %v747 = vpop.f32.mrb[0].mxu0
        %v748 = vadd.f32 %v506, %v747
        %749 = vmatprep.mubr.f32.mxu0 0.0
        %750 = vmatmul.mubr.f32.gmra.mrb[0].mxu0 %v376
        %v751 = vpop.f32.mrb[0].mxu0
        %v752 = vadd.f32 %v511, %v751
        %v753 = vpop.f32.mrb[0].mxu0
        %v754 = vadd.f32 %v511, %v753
        %755 = vmatprep.mubr.f32.mxu0 0.0
        %756 = vmatmul.mubr.f32.gmra.mrb[0].mxu0 %v377
        %v757 = vpop.f32.mrb[0].mxu0
        %v758 = vadd.f32 %v516, %v757
        %v759 = vpop.f32.mrb[0].mxu0
        %v760 = vadd.f32 %v516, %v759
        %761 = vmatprep.mubr.f32.mxu0 0.0
        %762 = vmatmul.mubr.f32.gmra.mrb[0].mxu0 %v378
        %v763 = vpop.f32.mrb[0].mxu0
        %v764 = vadd.f32 %v521, %v763
        %v765 = vpop.f32.mrb[0].mxu0
        %v766 = vadd.f32 %v521, %v765
        %767 = vmatprep.mubr.f32.mxu0 0.0
        %768 = vmatmul.mubr.f32.gmra.mrb[0].mxu0 %v379
        %v769 = vpop.f32.mrb[0].mxu0
        %v770 = vadd.f32 %v526, %v769
        %v771 = vpop.f32.mrb[0].mxu0
        %v772 = vadd.f32 %v526, %v771
        %773 = vmatprep.mubr.f32.mxu0 0.0
        %774 = vmatmul.mubr.f32.gmra.mrb[0].mxu0 %v380
        %v775 = vpop.f32.mrb[0].mxu0
        %v776 = vadd.f32 %v531, %v775
        %v777 = vpop.f32.mrb[0].mxu0
        %v778 = vadd.f32 %v531, %v777
        %779 = vmatprep.mubr.f32.mxu0 0.0
        %780 = vmatmul.mubr.f32.gmra.mrb[0].mxu0 %v381
        %v781 = vpop.f32.mrb[0].mxu0
        %v782 = vadd.f32 %v536, %v781
        %v783 = vpop.f32.mrb[0].mxu0
        %v784 = vadd.f32 %v536, %v783
        %785 = vmatprep.mubr.f32.mxu0 0.0
        %786 = vmatmul.mubr.f32.gmra.mrb[0].mxu0 %v382
        %v787 = vpop.f32.mrb[0].mxu0
        %v788 = vadd.f32 %v541, %v787
        %v789 = vpop.f32.mrb[0].mxu0
        %v790 = vadd.f32 %v541, %v789
        %791 = vmatprep.mubr.f32.mxu0 0.0
        %792 = vmatmul.mubr.f32.gmra.mrb[0].mxu0 %v383
        %v793 = vpop.f32.mrb[0].mxu0
        %v794 = vadd.f32 %v546, %v793
        %v795 = vpop.f32.mrb[0].mxu0
        %v796 = vadd.f32 %v546, %v795
        %797 = vmatprep.mubr.f32.mxu0 0.0
        %798 = vmatmul.mubr.f32.gmra.mrb[0].mxu0 %v384
        %v799 = vpop.f32.mrb[0].mxu0
        %v800 = vadd.f32 %v551, %v799
        %v801 = vpop.f32.mrb[0].mxu0
        %v802 = vadd.f32 %v551, %v801
        %803 = vmatprep.mubr.f32.mxu0 0.0
        %804 = vmatmul.mubr.f32.gmra.mrb[0].mxu0 %v385
        %v805 = vpop.f32.mrb[0].mxu0
        %v806 = vadd.f32 %v556, %v805
        %v807 = vpop.f32.mrb[0].mxu0
        %v808 = vadd.f32 %v556, %v807
        %809 = vmatprep.mubr.f32.mxu0 0.0
        %810 = vmatmul.mubr.f32.gmra.mrb[0].mxu0 %v386
        %v811 = vpop.f32.mrb[0].mxu0
        %v812 = vadd.f32 %v561, %v811
        %v813 = vpop.f32.mrb[0].mxu0
        %v814 = vadd.f32 %v561, %v813
        %815 = vmatprep.mubr.f32.mxu0 0.0
        %816 = vmatmul.mubr.f32.gmra.mrb[0].mxu0 %v387
        %v817 = vpop.f32.mrb[0].mxu0
        %v818 = vadd.f32 %v566, %v817
        %v819 = vpop.f32.mrb[0].mxu0
        %v820 = vadd.f32 %v566, %v819
        %821 = vmatprep.mubr.f32.mxu0 0.0
        %822 = vmatmul.mubr.f32.gmra.mrb[0].mxu0 %v388
        %v823 = vpop.f32.mrb[0].mxu0
        %v824 = vadd.f32 %v571, %v823
        %v825 = vpop.f32.mrb[0].mxu0
        %v826 = vadd.f32 %v571, %v825
        %827 = vmatprep.mubr.f32.mxu0 0.0
        %828 = vmatmul.mubr.f32.gmra.mrb[0].mxu0 %v389
        %v829 = vpop.f32.mrb[0].mxu0
        %v830 = vadd.f32 %v576, %v829
        %v831 = vpop.f32.mrb[0].mxu0
        %v832 = vadd.f32 %v576, %v831
        %833 = vmatprep.mubr.f32.mxu0 0.0
        %834 = vmatmul.mubr.f32.gmra.mrb[0].mxu0 %v390
        %v835 = vpop.f32.mrb[0].mxu0
        %v836 = vadd.f32 %v581, %v835
        %v837 = vpop.f32.mrb[0].mxu0
        %v838 = vadd.f32 %v581, %v837
        %839 = vdwg.mxu0
        %v840 = vmax.f32 %v650, %v698
        %v841 = vmax.f32 %v652, %v700
        %v842 = vmax.f32 %v656, %v704
        %v843 = vmax.f32 %v658, %v706
        %v844 = vmax.f32 %v662, %v710
        %v845 = vmax.f32 %v664, %v712
        %v846 = vmax.f32 %v668, %v716
        %v847 = vmax.f32 %v670, %v718
        %v848 = vmax.f32 %v674, %v722
        %v849 = vmax.f32 %v676, %v724
        %v850 = vmax.f32 %v680, %v728
        %v851 = vmax.f32 %v682, %v730
        %v852 = vmax.f32 %v686, %v734
        %v853 = vmax.f32 %v688, %v736
        %v854 = vmax.f32 %v692, %v740
        %v855 = vmax.f32 %v694, %v742
        %v856 = vmax.f32 %v840, %v746
        %v857 = vmax.f32 %v841, %v748
        %v858 = vmax.f32 %v842, %v752
        %v859 = vmax.f32 %v843, %v754
        %v860 = vmax.f32 %v844, %v758
        %v861 = vmax.f32 %v845, %v760
        %v862 = vmax.f32 %v846, %v764
        %v863 = vmax.f32 %v847, %v766
        %v864 = vmax.f32 %v848, %v770
        %v865 = vmax.f32 %v849, %v772
        %v866 = vmax.f32 %v850, %v776
        %v867 = vmax.f32 %v851, %v778
        %v868 = vmax.f32 %v852, %v782
        %v869 = vmax.f32 %v853, %v784
        %v870 = vmax.f32 %v854, %v788
        %v871 = vmax.f32 %v855, %v790
        %v872 = vmax.f32 %v856, %v794
        %v873 = vmax.f32 %v857, %v796
        %v874 = vmax.f32 %v858, %v800
        %v875 = vmax.f32 %v859, %v802
        %v876 = vmax.f32 %v860, %v806
        %v877 = vmax.f32 %v861, %v808
        %v878 = vmax.f32 %v862, %v812
        %v879 = vmax.f32 %v863, %v814
        %v880 = vmax.f32 %v864, %v818
        %v881 = vmax.f32 %v865, %v820
        %v882 = vmax.f32 %v866, %v824
        %v883 = vmax.f32 %v867, %v826
        %v884 = vmax.f32 %v868, %v830
        %v885 = vmax.f32 %v869, %v832
        %v886 = vmax.f32 %v870, %v836
        %v887 = vmax.f32 %v871, %v838
        %v888 = vld [vmem:[%s3] sm:$0xff]
        %v889 = vld [vmem:[%s3 + $0x8] sm:$0xff]
        %v890 = vld [vmem:[%s3 + $0x10] sm:$0xff]
        %v891 = vld [vmem:[%s3 + $0x18] sm:$0xff]
        %v892 = vld [vmem:[%s3 + $0x20] sm:$0xff]
        %v893 = vld [vmem:[%s3 + $0x28] sm:$0xff]
        %v894 = vld [vmem:[%s3 + $0x30] sm:$0xff]
        %v895 = vld [vmem:[%s3 + $0x38] sm:$0xff]
        %v896 = vld [vmem:[%s3 + $0x40] sm:$0xff]
        %v897 = vld [vmem:[%s3 + $0x48] sm:$0xff]
        %v898 = vld [vmem:[%s3 + $0x50] sm:$0xff]
        %v899 = vld [vmem:[%s3 + $0x58] sm:$0xff]
        %v900 = vld [vmem:[%s3 + $0x60] sm:$0xff]
        %v901 = vld [vmem:[%s3 + $0x68] sm:$0xff]
        %v902 = vld [vmem:[%s3 + $0x70] sm:$0xff]
        %v903 = vld [vmem:[%s3 + $0x78] sm:$0xff]
        %v904 = vld [vmem:[%s3 + $0x80] sm:$0xff]
        %v905 = vld [vmem:[%s3 + $0x88] sm:$0xff]
        %v906 = vld [vmem:[%s3 + $0x90] sm:$0xff]
        %v907 = vld [vmem:[%s3 + $0x98] sm:$0xff]
        %v908 = vld [vmem:[%s3 + $0xa0] sm:$0xff]
        %v909 = vld [vmem:[%s3 + $0xa8] sm:$0xff]
        %v910 = vld [vmem:[%s3 + $0xb0] sm:$0xff]
        %v911 = vld [vmem:[%s3 + $0xb8] sm:$0xff]
        %v912 = vld [vmem:[%s3 + $0xc0] sm:$0xff]
        %v913 = vld [vmem:[%s3 + $0xc8] sm:$0xff]
        %v914 = vld [vmem:[%s3 + $0xd0] sm:$0xff]
        %v915 = vld [vmem:[%s3 + $0xd8] sm:$0xff]
        %v916 = vld [vmem:[%s3 + $0xe0] sm:$0xff]
        %v917 = vld [vmem:[%s3 + $0xe8] sm:$0xff]
        %v918 = vld [vmem:[%s3 + $0xf0] sm:$0xff]
        %v919 = vld [vmem:[%s3 + $0xf8] sm:$0xff]
        %v920 = vld [vmem:[%s4] sm:$0xff]
        %v921 = vld [vmem:[%s4 + $0x8] sm:$0xff]
        %v922 = vld [vmem:[%s4 + $0x10] sm:$0xff]
        %v923 = vld [vmem:[%s4 + $0x18] sm:$0xff]
        %v924 = vld [vmem:[%s4 + $0x20] sm:$0xff]
        %v925 = vld [vmem:[%s4 + $0x28] sm:$0xff]
        %v926 = vld [vmem:[%s4 + $0x30] sm:$0xff]
        %v927 = vld [vmem:[%s4 + $0x38] sm:$0xff]
        %v928 = vld [vmem:[%s4 + $0x40] sm:$0xff]
        %v929 = vld [vmem:[%s4 + $0x48] sm:$0xff]
        %v930 = vld [vmem:[%s4 + $0x50] sm:$0xff]
        %v931 = vld [vmem:[%s4 + $0x58] sm:$0xff]
        %v932 = vld [vmem:[%s4 + $0x60] sm:$0xff]
        %v933 = vld [vmem:[%s4 + $0x68] sm:$0xff]
        %v934 = vld [vmem:[%s4 + $0x70] sm:$0xff]
        %v935 = vld [vmem:[%s4 + $0x78] sm:$0xff]
        %v936 = vld [vmem:[%s4 + $0x80] sm:$0xff]
        %v937 = vld [vmem:[%s4 + $0x88] sm:$0xff]
        %v938 = vld [vmem:[%s4 + $0x90] sm:$0xff]
        %v939 = vld [vmem:[%s4 + $0x98] sm:$0xff]
        %v940 = vld [vmem:[%s4 + $0xa0] sm:$0xff]
        %v941 = vld [vmem:[%s4 + $0xa8] sm:$0xff]
        %v942 = vld [vmem:[%s4 + $0xb0] sm:$0xff]
        %v943 = vld [vmem:[%s4 + $0xb8] sm:$0xff]
        %v944 = vld [vmem:[%s4 + $0xc0] sm:$0xff]
        %v945 = vld [vmem:[%s4 + $0xc8] sm:$0xff]
        %v946 = vld [vmem:[%s4 + $0xd0] sm:$0xff]
        %v947 = vld [vmem:[%s4 + $0xd8] sm:$0xff]
        %v948 = vld [vmem:[%s4 + $0xe0] sm:$0xff]
        %v949 = vld [vmem:[%s4 + $0xe8] sm:$0xff]
        %v950 = vld [vmem:[%s4 + $0xf0] sm:$0xff]
        %v951 = vld [vmem:[%s4 + $0xf8] sm:$0xff]
        %953 = vset.pattern.permute.xlu0 0
        %954 = vperm.xlu0 %953, %v920
        %v955 = vpop.permute.xlu0 %954
        %958 = vset.pattern.permute.xlu0 0
        %959 = vperm.xlu0 %958, %v921
        %v960 = vpop.permute.xlu0 %959
        %963 = vset.pattern.permute.xlu0 0
        %964 = vperm.xlu0 %963, %v922
        %v965 = vpop.permute.xlu0 %964
        %968 = vset.pattern.permute.xlu0 0
        %969 = vperm.xlu0 %968, %v923
        %v970 = vpop.permute.xlu0 %969
        %973 = vset.pattern.permute.xlu0 0
        %974 = vperm.xlu0 %973, %v924
        %v975 = vpop.permute.xlu0 %974
        %978 = vset.pattern.permute.xlu0 0
        %979 = vperm.xlu0 %978, %v925
        %v980 = vpop.permute.xlu0 %979
        %983 = vset.pattern.permute.xlu0 0
        %984 = vperm.xlu0 %983, %v926
        %v985 = vpop.permute.xlu0 %984
        %988 = vset.pattern.permute.xlu0 0
        %989 = vperm.xlu0 %988, %v927
        %v990 = vpop.permute.xlu0 %989
        %993 = vset.pattern.permute.xlu0 0
        %994 = vperm.xlu0 %993, %v928
        %v995 = vpop.permute.xlu0 %994
        %998 = vset.pattern.permute.xlu0 0
        %999 = vperm.xlu0 %998, %v929
        %v1000 = vpop.permute.xlu0 %999
        %1003 = vset.pattern.permute.xlu0 0
        %1004 = vperm.xlu0 %1003, %v930
        %v1005 = vpop.permute.xlu0 %1004
        %1008 = vset.pattern.permute.xlu0 0
        %1009 = vperm.xlu0 %1008, %v931
        %v1010 = vpop.permute.xlu0 %1009
        %1013 = vset.pattern.permute.xlu0 0
        %1014 = vperm.xlu0 %1013, %v932
        %v1015 = vpop.permute.xlu0 %1014
        %1018 = vset.pattern.permute.xlu0 0
        %1019 = vperm.xlu0 %1018, %v933
        %v1020 = vpop.permute.xlu0 %1019
        %1023 = vset.pattern.permute.xlu0 0
        %1024 = vperm.xlu0 %1023, %v934
        %v1025 = vpop.permute.xlu0 %1024
        %1028 = vset.pattern.permute.xlu0 0
        %1029 = vperm.xlu0 %1028, %v935
        %v1030 = vpop.permute.xlu0 %1029
        %1033 = vset.pattern.permute.xlu0 0
        %1034 = vperm.xlu0 %1033, %v936
        %v1035 = vpop.permute.xlu0 %1034
        %1038 = vset.pattern.permute.xlu0 0
        %1039 = vperm.xlu0 %1038, %v937
        %v1040 = vpop.permute.xlu0 %1039
        %1043 = vset.pattern.permute.xlu0 0
        %1044 = vperm.xlu0 %1043, %v938
        %v1045 = vpop.permute.xlu0 %1044
        %1048 = vset.pattern.permute.xlu0 0
        %1049 = vperm.xlu0 %1048, %v939
        %v1050 = vpop.permute.xlu0 %1049
        %1053 = vset.pattern.permute.xlu0 0
        %1054 = vperm.xlu0 %1053, %v940
        %v1055 = vpop.permute.xlu0 %1054
        %1058 = vset.pattern.permute.xlu0 0
        %1059 = vperm.xlu0 %1058, %v941
        %v1060 = vpop.permute.xlu0 %1059
        %1063 = vset.pattern.permute.xlu0 0
        %1064 = vperm.xlu0 %1063, %v942
        %v1065 = vpop.permute.xlu0 %1064
        %1068 = vset.pattern.permute.xlu0 0
        %1069 = vperm.xlu0 %1068, %v943
        %v1070 = vpop.permute.xlu0 %1069
        %1073 = vset.pattern.permute.xlu0 0
        %1074 = vperm.xlu0 %1073, %v944
        %v1075 = vpop.permute.xlu0 %1074
        %1078 = vset.pattern.permute.xlu0 0
        %1079 = vperm.xlu0 %1078, %v945
        %v1080 = vpop.permute.xlu0 %1079
        %1083 = vset.pattern.permute.xlu0 0
        %1084 = vperm.xlu0 %1083, %v946
        %v1085 = vpop.permute.xlu0 %1084
        %1088 = vset.pattern.permute.xlu0 0
        %1089 = vperm.xlu0 %1088, %v947
        %v1090 = vpop.permute.xlu0 %1089
        %1093 = vset.pattern.permute.xlu0 0
        %1094 = vperm.xlu0 %1093, %v948
        %v1095 = vpop.permute.xlu0 %1094
        %1098 = vset.pattern.permute.xlu0 0
        %1099 = vperm.xlu0 %1098, %v949
        %v1100 = vpop.permute.xlu0 %1099
        %1103 = vset.pattern.permute.xlu0 0
        %1104 = vperm.xlu0 %1103, %v950
        %v1105 = vpop.permute.xlu0 %1104
        %1108 = vset.pattern.permute.xlu0 0
        %1109 = vperm.xlu0 %1108, %v951
        %v1110 = vpop.permute.xlu0 %1109
        %vm1112 = vcmask 523264
        %v1114 = vsel %vm1112, %v888, 0
        %v1117 = vsel %vm1112, %v889, 0
        %v1120 = vsel %vm1112, %v890, 0
        %v1123 = vsel %vm1112, %v891, 0
        %v1126 = vsel %vm1112, %v892, 0
        %v1129 = vsel %vm1112, %v893, 0
        %v1132 = vsel %vm1112, %v894, 0
        %v1135 = vsel %vm1112, %v895, 0
        %v1138 = vsel %vm1112, %v896, 0
        %v1141 = vsel %vm1112, %v897, 0
        %v1144 = vsel %vm1112, %v898, 0
        %v1147 = vsel %vm1112, %v899, 0
        %v1150 = vsel %vm1112, %v900, 0
        %v1153 = vsel %vm1112, %v901, 0
        %v1156 = vsel %vm1112, %v902, 0
        %v1159 = vsel %vm1112, %v903, 0
        %v1162 = vsel %vm1112, %v904, 0
        %v1165 = vsel %vm1112, %v905, 0
        %v1168 = vsel %vm1112, %v906, 0
        %v1171 = vsel %vm1112, %v907, 0
        %v1174 = vsel %vm1112, %v908, 0
        %v1177 = vsel %vm1112, %v909, 0
        %v1180 = vsel %vm1112, %v910, 0
        %v1183 = vsel %vm1112, %v911, 0
        %v1186 = vsel %vm1112, %v912, 0
        %v1189 = vsel %vm1112, %v913, 0
        %v1192 = vsel %vm1112, %v914, 0
        %v1195 = vsel %vm1112, %v915, 0
        %v1198 = vsel %vm1112, %v916, 0
        %v1201 = vsel %vm1112, %v917, 0
        %v1204 = vsel %vm1112, %v918, 0
        %v1207 = vsel %vm1112, %v919, 0
        %1209 = vmatprep.subr.mxu0 %v873
        %1210 = vmatpush1.msra.mxu0 %v872
        %1211 = vmatprep.subr.mxu0 %v875
        %1212 = vmatpush1.msra.mxu0 %v874
        %1213 = vmatprep.subr.mxu0 %v877
        %1214 = vmatpush1.msra.mxu0 %v876
        %1215 = vmatprep.subr.mxu0 %v879
        %1216 = vmatpush1.msra.mxu0 %v878
        %1217 = vmatprep.subr.mxu0 %v881
        %1218 = vmatpush1.msra.mxu0 %v880
        %1219 = vmatprep.subr.mxu0 %v883
        %1220 = vmatpush1.msra.mxu0 %v882
        %1221 = vmatprep.subr.mxu0 %v885
        %1222 = vmatpush1.msra.mxu0 %v884
        %1223 = vmatprep.subr.mxu0 %v887
        %1224 = vmatpush1.msra.mxu0 %v886
        %1225 = vmatprep.subr.mxu0 0.0
        %1226 = vmatpush1.msra.mxu0 0.0
        %1227 = vmatprep.subr.mxu0 0.0
        %1228 = vmatpush1.msra.mxu0 0.0
        %1229 = vmatprep.subr.mxu0 0.0
        %1230 = vmatpush1.msra.mxu0 0.0
        %1231 = vmatprep.subr.mxu0 0.0
        %1232 = vmatpush1.msra.mxu0 0.0
        %1233 = vmatprep.subr.mxu0 0.0
        %1234 = vmatpush1.msra.mxu0 0.0
        %1235 = vmatprep.subr.mxu0 0.0
        %1236 = vmatpush1.msra.mxu0 0.0
        %1237 = vmatprep.subr.mxu0 0.0
        %1238 = vmatpush1.msra.mxu0 0.0
        %1239 = vmatprep.subr.mxu0 0.0
        %1240 = vmatpush1.msra.mxu0 0.0
        %1241 = vmatprep.subr.mxu0 0.0
        %1242 = vmatpush1.msra.mxu0 0.0
        %1243 = vmatprep.subr.mxu0 0.0
        %1244 = vmatpush1.msra.mxu0 0.0
        %1245 = vmatprep.subr.mxu0 0.0
        %1246 = vmatpush1.msra.mxu0 0.0
        %1247 = vmatprep.subr.mxu0 0.0
        %1248 = vmatpush1.msra.mxu0 0.0
        %1249 = vmatprep.subr.mxu0 0.0
        %1250 = vmatpush1.msra.mxu0 0.0
        %1251 = vmatprep.subr.mxu0 0.0
        %1252 = vmatpush1.msra.mxu0 0.0
        %1253 = vmatprep.subr.mxu0 0.0
        %1254 = vmatpush1.msra.mxu0 0.0
        %1255 = vmatprep.subr.mxu0 0.0
        %1256 = vmatpush1.msra.mxu0 0.0
        %1257 = vmatprep.subr.mxu0 0.0
        %1258 = vmatpush1.msra.mxu0 0.0
        %1259 = vmatprep.subr.mxu0 0.0
        %1260 = vmatpush1.msra.mxu0 0.0
        %1261 = vmatprep.subr.mxu0 0.0
        %1262 = vmatpush1.msra.mxu0 0.0
        %1263 = vmatprep.subr.mxu0 0.0
        %1264 = vmatpush1.msra.mxu0 0.0
        %1265 = vmatprep.subr.mxu0 0.0
        %1266 = vmatpush1.msra.mxu0 0.0
        %1267 = vmatprep.subr.mxu0 0.0
        %1268 = vmatpush1.msra.mxu0 0.0
        %1269 = vmatprep.subr.mxu0 0.0
        %1270 = vmatpush1.msra.mxu0 0.0
        %1271 = vmatprep.subr.mxu0 0.0
        %1272 = vmatpush1.msra.mxu0 0.0
        %1273 = vmatprep.mubr.f32.mxu0 0.0
        %1274 = vmatmul.mubr.f32.gmra.mrb[0].mxu0 %v1114
        %v1275 = vpop.f32.mrb[0].mxu0
        %v1276 = vadd.f32 %v955, %v1275
        %v1277 = vpop.f32.mrb[0].mxu0
        %v1278 = vadd.f32 %v955, %v1277
        %1279 = vmatprep.mubr.f32.mxu0 0.0
        %1280 = vmatmul.mubr.f32.gmra.mrb[0].mxu0 %v1117
        %v1281 = vpop.f32.mrb[0].mxu0
        %v1282 = vadd.f32 %v960, %v1281
        %v1283 = vpop.f32.mrb[0].mxu0
        %v1284 = vadd.f32 %v960, %v1283
        %1285 = vmatprep.mubr.f32.mxu0 0.0
        %1286 = vmatmul.mubr.f32.gmra.mrb[0].mxu0 %v1120
        %v1287 = vpop.f32.mrb[0].mxu0
        %v1288 = vadd.f32 %v965, %v1287
        %v1289 = vpop.f32.mrb[0].mxu0
        %v1290 = vadd.f32 %v965, %v1289
        %1291 = vmatprep.mubr.f32.mxu0 0.0
        %1292 = vmatmul.mubr.f32.gmra.mrb[0].mxu0 %v1123
        %v1293 = vpop.f32.mrb[0].mxu0
        %v1294 = vadd.f32 %v970, %v1293
        %v1295 = vpop.f32.mrb[0].mxu0
        %v1296 = vadd.f32 %v970, %v1295
        %1297 = vmatprep.mubr.f32.mxu0 0.0
        %1298 = vmatmul.mubr.f32.gmra.mrb[0].mxu0 %v1126
        %v1299 = vpop.f32.mrb[0].mxu0
        %v1300 = vadd.f32 %v975, %v1299
        %v1301 = vpop.f32.mrb[0].mxu0
        %v1302 = vadd.f32 %v975, %v1301
        %1303 = vmatprep.mubr.f32.mxu0 0.0
        %1304 = vmatmul.mubr.f32.gmra.mrb[0].mxu0 %v1129
        %v1305 = vpop.f32.mrb[0].mxu0
        %v1306 = vadd.f32 %v980, %v1305
        %v1307 = vpop.f32.mrb[0].mxu0
        %v1308 = vadd.f32 %v980, %v1307
        %1309 = vmatprep.mubr.f32.mxu0 0.0
        %1310 = vmatmul.mubr.f32.gmra.mrb[0].mxu0 %v1132
        %v1311 = vpop.f32.mrb[0].mxu0
        %v1312 = vadd.f32 %v985, %v1311
        %v1313 = vpop.f32.mrb[0].mxu0
        %v1314 = vadd.f32 %v985, %v1313
        %1315 = vmatprep.mubr.f32.mxu0 0.0
        %1316 = vmatmul.mubr.f32.gmra.mrb[0].mxu0 %v1135
        %v1317 = vpop.f32.mrb[0].mxu0
        %v1318 = vadd.f32 %v990, %v1317
        %v1319 = vpop.f32.mrb[0].mxu0
        %v1320 = vadd.f32 %v990, %v1319
        %1321 = vmatprep.mubr.f32.mxu0 0.0
        %1322 = vmatmul.mubr.f32.gmra.mrb[0].mxu0 %v1138
        %v1323 = vpop.f32.mrb[0].mxu0
        %v1324 = vadd.f32 %v995, %v1323
        %v1325 = vpop.f32.mrb[0].mxu0
        %v1326 = vadd.f32 %v995, %v1325
        %1327 = vmatprep.mubr.f32.mxu0 0.0
        %1328 = vmatmul.mubr.f32.gmra.mrb[0].mxu0 %v1141
        %v1329 = vpop.f32.mrb[0].mxu0
        %v1330 = vadd.f32 %v1000, %v1329
        %v1331 = vpop.f32.mrb[0].mxu0
        %v1332 = vadd.f32 %v1000, %v1331
        %1333 = vmatprep.mubr.f32.mxu0 0.0
        %1334 = vmatmul.mubr.f32.gmra.mrb[0].mxu0 %v1144
        %v1335 = vpop.f32.mrb[0].mxu0
        %v1336 = vadd.f32 %v1005, %v1335
        %v1337 = vpop.f32.mrb[0].mxu0
        %v1338 = vadd.f32 %v1005, %v1337
        %1339 = vmatprep.mubr.f32.mxu0 0.0
        %1340 = vmatmul.mubr.f32.gmra.mrb[0].mxu0 %v1147
        %v1341 = vpop.f32.mrb[0].mxu0
        %v1342 = vadd.f32 %v1010, %v1341
        %v1343 = vpop.f32.mrb[0].mxu0
        %v1344 = vadd.f32 %v1010, %v1343
        %1345 = vmatprep.mubr.f32.mxu0 0.0
        %1346 = vmatmul.mubr.f32.gmra.mrb[0].mxu0 %v1150
        %v1347 = vpop.f32.mrb[0].mxu0
        %v1348 = vadd.f32 %v1015, %v1347
        %v1349 = vpop.f32.mrb[0].mxu0
        %v1350 = vadd.f32 %v1015, %v1349
        %1351 = vmatprep.mubr.f32.mxu0 0.0
        %1352 = vmatmul.mubr.f32.gmra.mrb[0].mxu0 %v1153
        %v1353 = vpop.f32.mrb[0].mxu0
        %v1354 = vadd.f32 %v1020, %v1353
        %v1355 = vpop.f32.mrb[0].mxu0
        %v1356 = vadd.f32 %v1020, %v1355
        %1357 = vmatprep.mubr.f32.mxu0 0.0
        %1358 = vmatmul.mubr.f32.gmra.mrb[0].mxu0 %v1156
        %v1359 = vpop.f32.mrb[0].mxu0
        %v1360 = vadd.f32 %v1025, %v1359
        %v1361 = vpop.f32.mrb[0].mxu0
        %v1362 = vadd.f32 %v1025, %v1361
        %1363 = vmatprep.mubr.f32.mxu0 0.0
        %1364 = vmatmul.mubr.f32.gmra.mrb[0].mxu0 %v1159
        %v1365 = vpop.f32.mrb[0].mxu0
        %v1366 = vadd.f32 %v1030, %v1365
        %v1367 = vpop.f32.mrb[0].mxu0
        %v1368 = vadd.f32 %v1030, %v1367
        %1369 = vmatprep.mubr.f32.mxu0 0.0
        %1370 = vmatmul.mubr.f32.gmra.mrb[0].mxu0 %v1162
        %v1371 = vpop.f32.mrb[0].mxu0
        %v1372 = vadd.f32 %v1035, %v1371
        %v1373 = vpop.f32.mrb[0].mxu0
        %v1374 = vadd.f32 %v1035, %v1373
        %1375 = vmatprep.mubr.f32.mxu0 0.0
        %1376 = vmatmul.mubr.f32.gmra.mrb[0].mxu0 %v1165
        %v1377 = vpop.f32.mrb[0].mxu0
        %v1378 = vadd.f32 %v1040, %v1377
        %v1379 = vpop.f32.mrb[0].mxu0
        %v1380 = vadd.f32 %v1040, %v1379
        %1381 = vmatprep.mubr.f32.mxu0 0.0
        %1382 = vmatmul.mubr.f32.gmra.mrb[0].mxu0 %v1168
        %v1383 = vpop.f32.mrb[0].mxu0
        %v1384 = vadd.f32 %v1045, %v1383
        %v1385 = vpop.f32.mrb[0].mxu0
        %v1386 = vadd.f32 %v1045, %v1385
        %1387 = vmatprep.mubr.f32.mxu0 0.0
        %1388 = vmatmul.mubr.f32.gmra.mrb[0].mxu0 %v1171
        %v1389 = vpop.f32.mrb[0].mxu0
        %v1390 = vadd.f32 %v1050, %v1389
        %v1391 = vpop.f32.mrb[0].mxu0
        %v1392 = vadd.f32 %v1050, %v1391
        %1393 = vmatprep.mubr.f32.mxu0 0.0
        %1394 = vmatmul.mubr.f32.gmra.mrb[0].mxu0 %v1174
        %v1395 = vpop.f32.mrb[0].mxu0
        %v1396 = vadd.f32 %v1055, %v1395
        %v1397 = vpop.f32.mrb[0].mxu0
        %v1398 = vadd.f32 %v1055, %v1397
        %1399 = vmatprep.mubr.f32.mxu0 0.0
        %1400 = vmatmul.mubr.f32.gmra.mrb[0].mxu0 %v1177
        %v1401 = vpop.f32.mrb[0].mxu0
        %v1402 = vadd.f32 %v1060, %v1401
        %v1403 = vpop.f32.mrb[0].mxu0
        %v1404 = vadd.f32 %v1060, %v1403
        %1405 = vmatprep.mubr.f32.mxu0 0.0
        %1406 = vmatmul.mubr.f32.gmra.mrb[0].mxu0 %v1180
        %v1407 = vpop.f32.mrb[0].mxu0
        %v1408 = vadd.f32 %v1065, %v1407
        %v1409 = vpop.f32.mrb[0].mxu0
        %v1410 = vadd.f32 %v1065, %v1409
        %1411 = vmatprep.mubr.f32.mxu0 0.0
        %1412 = vmatmul.mubr.f32.gmra.mrb[0].mxu0 %v1183
        %v1413 = vpop.f32.mrb[0].mxu0
        %v1414 = vadd.f32 %v1070, %v1413
        %v1415 = vpop.f32.mrb[0].mxu0
        %v1416 = vadd.f32 %v1070, %v1415
        %1417 = vmatprep.mubr.f32.mxu0 0.0
        %1418 = vmatmul.mubr.f32.gmra.mrb[0].mxu0 %v1186
        %v1419 = vpop.f32.mrb[0].mxu0
        %v1420 = vadd.f32 %v1075, %v1419
        %v1421 = vpop.f32.mrb[0].mxu0
        %v1422 = vadd.f32 %v1075, %v1421
        %1423 = vmatprep.mubr.f32.mxu0 0.0
        %1424 = vmatmul.mubr.f32.gmra.mrb[0].mxu0 %v1189
        %v1425 = vpop.f32.mrb[0].mxu0
        %v1426 = vadd.f32 %v1080, %v1425
        %v1427 = vpop.f32.mrb[0].mxu0
        %v1428 = vadd.f32 %v1080, %v1427
        %1429 = vmatprep.mubr.f32.mxu0 0.0
        %1430 = vmatmul.mubr.f32.gmra.mrb[0].mxu0 %v1192
        %v1431 = vpop.f32.mrb[0].mxu0
        %v1432 = vadd.f32 %v1085, %v1431
        %v1433 = vpop.f32.mrb[0].mxu0
        %v1434 = vadd.f32 %v1085, %v1433
        %1435 = vmatprep.mubr.f32.mxu0 0.0
        %1436 = vmatmul.mubr.f32.gmra.mrb[0].mxu0 %v1195
        %v1437 = vpop.f32.mrb[0].mxu0
        %v1438 = vadd.f32 %v1090, %v1437
        %v1439 = vpop.f32.mrb[0].mxu0
        %v1440 = vadd.f32 %v1090, %v1439
        %1441 = vmatprep.mubr.f32.mxu0 0.0
        %1442 = vmatmul.mubr.f32.gmra.mrb[0].mxu0 %v1198
        %v1443 = vpop.f32.mrb[0].mxu0
        %v1444 = vadd.f32 %v1095, %v1443
        %v1445 = vpop.f32.mrb[0].mxu0
        %v1446 = vadd.f32 %v1095, %v1445
        %1447 = vmatprep.mubr.f32.mxu0 0.0
        %1448 = vmatmul.mubr.f32.gmra.mrb[0].mxu0 %v1201
        %v1449 = vpop.f32.mrb[0].mxu0
        %v1450 = vadd.f32 %v1100, %v1449
        %v1451 = vpop.f32.mrb[0].mxu0
        %v1452 = vadd.f32 %v1100, %v1451
        %1453 = vmatprep.mubr.f32.mxu0 0.0
        %1454 = vmatmul.mubr.f32.gmra.mrb[0].mxu0 %v1204
        %v1455 = vpop.f32.mrb[0].mxu0
        %v1456 = vadd.f32 %v1105, %v1455
        %v1457 = vpop.f32.mrb[0].mxu0
        %v1458 = vadd.f32 %v1105, %v1457
        %1459 = vmatprep.mubr.f32.mxu0 0.0
        %1460 = vmatmul.mubr.f32.gmra.mrb[0].mxu0 %v1207
        %v1461 = vpop.f32.mrb[0].mxu0
        %v1462 = vadd.f32 %v1110, %v1461
        %v1463 = vpop.f32.mrb[0].mxu0
        %v1464 = vadd.f32 %v1110, %v1463
        %1465 = vdwg.mxu0
        %v1466 = vmax.f32 %v1276, %v1324
        %v1467 = vmax.f32 %v1278, %v1326
        %v1468 = vmax.f32 %v1282, %v1330
        %v1469 = vmax.f32 %v1284, %v1332
        %v1470 = vmax.f32 %v1288, %v1336
        %v1471 = vmax.f32 %v1290, %v1338
        %v1472 = vmax.f32 %v1294, %v1342
        %v1473 = vmax.f32 %v1296, %v1344
        %v1474 = vmax.f32 %v1300, %v1348
        %v1475 = vmax.f32 %v1302, %v1350
        %v1476 = vmax.f32 %v1306, %v1354
        %v1477 = vmax.f32 %v1308, %v1356
        %v1478 = vmax.f32 %v1312, %v1360
        %v1479 = vmax.f32 %v1314, %v1362
        %v1480 = vmax.f32 %v1318, %v1366
        %v1481 = vmax.f32 %v1320, %v1368
        %v1482 = vmax.f32 %v1466, %v1372
        %v1483 = vmax.f32 %v1467, %v1374
        %v1484 = vmax.f32 %v1468, %v1378
        %v1485 = vmax.f32 %v1469, %v1380
        %v1486 = vmax.f32 %v1470, %v1384
        %v1487 = vmax.f32 %v1471, %v1386
        %v1488 = vmax.f32 %v1472, %v1390
        %v1489 = vmax.f32 %v1473, %v1392
        %v1490 = vmax.f32 %v1474, %v1396
        %v1491 = vmax.f32 %v1475, %v1398
        %v1492 = vmax.f32 %v1476, %v1402
        %v1493 = vmax.f32 %v1477, %v1404
        %v1494 = vmax.f32 %v1478, %v1408
        %v1495 = vmax.f32 %v1479, %v1410
        %v1496 = vmax.f32 %v1480, %v1414
        %v1497 = vmax.f32 %v1481, %v1416
        %v1498 = vmax.f32 %v1482, %v1420
        %v1499 = vmax.f32 %v1483, %v1422
        %v1500 = vmax.f32 %v1484, %v1426
        %v1501 = vmax.f32 %v1485, %v1428
        %v1502 = vmax.f32 %v1486, %v1432
        %v1503 = vmax.f32 %v1487, %v1434
        %v1504 = vmax.f32 %v1488, %v1438
        %v1505 = vmax.f32 %v1489, %v1440
        %v1506 = vmax.f32 %v1490, %v1444
        %v1507 = vmax.f32 %v1491, %v1446
        %v1508 = vmax.f32 %v1492, %v1450
        %v1509 = vmax.f32 %v1493, %v1452
        %v1510 = vmax.f32 %v1494, %v1456
        %v1511 = vmax.f32 %v1495, %v1458
        %v1512 = vmax.f32 %v1496, %v1462
        %v1513 = vmax.f32 %v1497, %v1464
        %1514 = vst [vmem:[#allocation2] sm:$0xff] %v872
        %1515 = vst [vmem:[#allocation2 + $0x8] sm:$0xff] %v873
        %1516 = vst [vmem:[#allocation2 + $0x10] sm:$0xff] %v874
        %1517 = vst [vmem:[#allocation2 + $0x18] sm:$0xff] %v875
        %1518 = vst [vmem:[#allocation2 + $0x20] sm:$0xff] %v876
        %1519 = vst [vmem:[#allocation2 + $0x28] sm:$0xff] %v877
        %1520 = vst [vmem:[#allocation2 + $0x30] sm:$0xff] %v878
        %1521 = vst [vmem:[#allocation2 + $0x38] sm:$0xff] %v879
        %1522 = vst [vmem:[#allocation2 + $0x40] sm:$0xff] %v880
        %1523 = vst [vmem:[#allocation2 + $0x48] sm:$0xff] %v881
        %1524 = vst [vmem:[#allocation2 + $0x50] sm:$0xff] %v882
        %1525 = vst [vmem:[#allocation2 + $0x58] sm:$0xff] %v883
        %1526 = vst [vmem:[#allocation2 + $0x60] sm:$0xff] %v884
        %1527 = vst [vmem:[#allocation2 + $0x68] sm:$0xff] %v885
        %1528 = vst [vmem:[#allocation2 + $0x70] sm:$0xff] %v886
        %1529 = vst [vmem:[#allocation2 + $0x78] sm:$0xff] %v887
        %1530 = vst [vmem:[#allocation2 + $0x80] sm:$0xff] %v1498
        %1531 = vst [vmem:[#allocation2 + $0x88] sm:$0xff] %v1499
        %1532 = vst [vmem:[#allocation2 + $0x90] sm:$0xff] %v1500
        %1533 = vst [vmem:[#allocation2 + $0x98] sm:$0xff] %v1501
        %1534 = vst [vmem:[#allocation2 + $0xa0] sm:$0xff] %v1502
        %1535 = vst [vmem:[#allocation2 + $0xa8] sm:$0xff] %v1503
        %1536 = vst [vmem:[#allocation2 + $0xb0] sm:$0xff] %v1504
        %1537 = vst [vmem:[#allocation2 + $0xb8] sm:$0xff] %v1505
        %1538 = vst [vmem:[#allocation2 + $0xc0] sm:$0xff] %v1506
        %1539 = vst [vmem:[#allocation2 + $0xc8] sm:$0xff] %v1507
        %1540 = vst [vmem:[#allocation2 + $0xd0] sm:$0xff] %v1508
        %1541 = vst [vmem:[#allocation2 + $0xd8] sm:$0xff] %v1509
        %1542 = vst [vmem:[#allocation2 + $0xe0] sm:$0xff] %v1510
        %1543 = vst [vmem:[#allocation2 + $0xe8] sm:$0xff] %v1511
        %1544 = vst [vmem:[#allocation2 + $0xf0] sm:$0xff] %v1512
        %1545 = vst [vmem:[#allocation2 + $0xf8] sm:$0xff] %v1513
        %v1546 = vld [vmem:[%s5] sm:$0xff]
        %v1547 = vld [vmem:[#allocation2] sm:$0xff]
        %v1548 = vld [vmem:[#allocation2 + $0x8] sm:$0xff]
        %v1549 = vld [vmem:[#allocation2 + $0x10] sm:$0xff]
        %v1550 = vld [vmem:[#allocation2 + $0x18] sm:$0xff]
        %v1551 = vld [vmem:[#allocation2 + $0x20] sm:$0xff]
        %v1552 = vld [vmem:[#allocation2 + $0x28] sm:$0xff]
        %v1553 = vld [vmem:[#allocation2 + $0x30] sm:$0xff]
        %v1554 = vld [vmem:[#allocation2 + $0x38] sm:$0xff]
        %v1555 = vld [vmem:[#allocation2 + $0x40] sm:$0xff]
        %v1556 = vld [vmem:[#allocation2 + $0x48] sm:$0xff]
        %v1557 = vld [vmem:[#allocation2 + $0x50] sm:$0xff]
        %v1558 = vld [vmem:[#allocation2 + $0x58] sm:$0xff]
        %v1559 = vld [vmem:[#allocation2 + $0x60] sm:$0xff]
        %v1560 = vld [vmem:[#allocation2 + $0x68] sm:$0xff]
        %v1561 = vld [vmem:[#allocation2 + $0x70] sm:$0xff]
        %v1562 = vld [vmem:[#allocation2 + $0x78] sm:$0xff]
        %v1563 = vld [vmem:[#allocation2 + $0x80] sm:$0xff]
        %v1564 = vld [vmem:[#allocation2 + $0x88] sm:$0xff]
        %v1565 = vld [vmem:[#allocation2 + $0x90] sm:$0xff]
        %v1566 = vld [vmem:[#allocation2 + $0x98] sm:$0xff]
        %v1567 = vld [vmem:[#allocation2 + $0xa0] sm:$0xff]
        %v1568 = vld [vmem:[#allocation2 + $0xa8] sm:$0xff]
        %v1569 = vld [vmem:[#allocation2 + $0xb0] sm:$0xff]
        %v1570 = vld [vmem:[#allocation2 + $0xb8] sm:$0xff]
        %v1571 = vld [vmem:[#allocation2 + $0xc0] sm:$0xff]
        %v1572 = vld [vmem:[#allocation2 + $0xc8] sm:$0xff]
        %v1573 = vld [vmem:[#allocation2 + $0xd0] sm:$0xff]
        %v1574 = vld [vmem:[#allocation2 + $0xd8] sm:$0xff]
        %v1575 = vld [vmem:[#allocation2 + $0xe0] sm:$0xff]
        %v1576 = vld [vmem:[#allocation2 + $0xe8] sm:$0xff]
        %v1577 = vld [vmem:[#allocation2 + $0xf0] sm:$0xff]
        %v1578 = vld [vmem:[#allocation2 + $0xf8] sm:$0xff]
        %v1579 = vld [vmem:[%s6] sm:$0xff]
        %1581 = vset.pattern.permute.xlu0 0
        %1582 = vperm.xlu0 %1581, %v1579
        %v1583 = vpop.permute.xlu0 %1582
        %1585 = vmatprep.subr.mxu0 %v1548
        %1586 = vmatpush1.msra.mxu0 %v1547
        %1587 = vmatprep.subr.mxu0 %v1550
        %1588 = vmatpush1.msra.mxu0 %v1549
        %1589 = vmatprep.subr.mxu0 %v1552
        %1590 = vmatpush1.msra.mxu0 %v1551
        %1591 = vmatprep.subr.mxu0 %v1554
        %1592 = vmatpush1.msra.mxu0 %v1553
        %1593 = vmatprep.subr.mxu0 %v1556
        %1594 = vmatpush1.msra.mxu0 %v1555
        %1595 = vmatprep.subr.mxu0 %v1558
        %1596 = vmatpush1.msra.mxu0 %v1557
        %1597 = vmatprep.subr.mxu0 %v1560
        %1598 = vmatpush1.msra.mxu0 %v1559
        %1599 = vmatprep.subr.mxu0 %v1562
        %1600 = vmatpush1.msra.mxu0 %v1561
        %1601 = vmatprep.subr.mxu0 %v1564
        %1602 = vmatpush1.msra.mxu0 %v1563
        %1603 = vmatprep.subr.mxu0 %v1566
        %1604 = vmatpush1.msra.mxu0 %v1565
        %1605 = vmatprep.subr.mxu0 %v1568
        %1606 = vmatpush1.msra.mxu0 %v1567
        %1607 = vmatprep.subr.mxu0 %v1570
        %1608 = vmatpush1.msra.mxu0 %v1569
        %1609 = vmatprep.subr.mxu0 %v1572
        %1610 = vmatpush1.msra.mxu0 %v1571
        %1611 = vmatprep.subr.mxu0 %v1574
        %1612 = vmatpush1.msra.mxu0 %v1573
        %1613 = vmatprep.subr.mxu0 %v1576
        %1614 = vmatpush1.msra.mxu0 %v1575
        %1615 = vmatprep.subr.mxu0 %v1578
        %1616 = vmatpush1.msra.mxu0 %v1577
        %1617 = vmatprep.subr.mxu0 0.0
        %1618 = vmatpush1.msra.mxu0 0.0
        %1619 = vmatprep.subr.mxu0 0.0
        %1620 = vmatpush1.msra.mxu0 0.0
        %1621 = vmatprep.subr.mxu0 0.0
        %1622 = vmatpush1.msra.mxu0 0.0
        %1623 = vmatprep.subr.mxu0 0.0
        %1624 = vmatpush1.msra.mxu0 0.0
        %1625 = vmatprep.subr.mxu0 0.0
        %1626 = vmatpush1.msra.mxu0 0.0
        %1627 = vmatprep.subr.mxu0 0.0
        %1628 = vmatpush1.msra.mxu0 0.0
        %1629 = vmatprep.subr.mxu0 0.0
        %1630 = vmatpush1.msra.mxu0 0.0
        %1631 = vmatprep.subr.mxu0 0.0
        %1632 = vmatpush1.msra.mxu0 0.0
        %1633 = vmatprep.subr.mxu0 0.0
        %1634 = vmatpush1.msra.mxu0 0.0
        %1635 = vmatprep.subr.mxu0 0.0
        %1636 = vmatpush1.msra.mxu0 0.0
        %1637 = vmatprep.subr.mxu0 0.0
        %1638 = vmatpush1.msra.mxu0 0.0
        %1639 = vmatprep.subr.mxu0 0.0
        %1640 = vmatpush1.msra.mxu0 0.0
        %1641 = vmatprep.subr.mxu0 0.0
        %1642 = vmatpush1.msra.mxu0 0.0
        %1643 = vmatprep.subr.mxu0 0.0
        %1644 = vmatpush1.msra.mxu0 0.0
        %1645 = vmatprep.subr.mxu0 0.0
        %1646 = vmatpush1.msra.mxu0 0.0
        %1647 = vmatprep.subr.mxu0 0.0
        %1648 = vmatpush1.msra.mxu0 0.0
        %1649 = vmatprep.mubr.f32.mxu0 0.0
        %1650 = vmatmul.mubr.f32.gmra.mrb[0].mxu0 %v1546
        %v1651 = vpop.f32.mrb[0].mxu0
        %v1652 = vadd.f32 %v1583, %v1651
        %v1653 = vpop.f32.mrb[0].mxu0
        %v1654 = vadd.f32 %v1583, %v1653
        %1655 = vdwg.mxu0
        %v1656 = vrot.slane %v1652, 4
        %v1657 = vmax.f32 %v1652, %v1656
        %v1658 = vrot.slane %v1657, 2
        %v1659 = vmax.f32 %v1657, %v1658
        %v1660 = vrot.slane %v1659, 1
        %v1661 = vmax.f32 %v1659, %v1660
        %v1662 = vrot.slane %v1654, 4
        %v1663 = vmax.f32 %v1654, %v1662
        %v1664 = vrot.slane %v1663, 2
        %v1665 = vmax.f32 %v1663, %v1664
        %v1666 = vrot.slane %v1665, 1
        %v1667 = vmax.f32 %v1665, %v1666
        %v1670 = vcombine.low %v1661, %v1667
        %v1672 = vunpack.c.l.s4 1966171168
        %v1673 = vunpack.c.0.s8 %v1672
        %v1674 = vlaneseq
        %v1675 = vshrl.u32 %v1674, 7
        %v1676 = vsub.s32 %v1673, %v1675
        %v1677 = vrot.slane %v1670, %v1676
        %v1679 = vunpack.c.l.s4 1966171168
        %v1680 = vunpack.c.0.s8 %v1679
        %v1681 = vlaneseq
        %v1682 = vshrl.u32 %v1681, 7
        %v1683 = vsub.s32 %v1680, %v1682
        %v1684 = vrot.slane %v1677, %v1683
        %v1686 = vlaneseq
        %vm1687 = vcmp.ge.s32.totalorder %v1686, 0
        %vm1688 = vcmp.lt.s32.totalorder %v1686, 256
        %vm1689 = vmand %vm1687, %vm1688
        %1690 = vst.msk [vmem:[%s311] sm:$0x3] %vm1689, %v1684
        %s1691 = sand.u32 %s202, 1
        %s1692 = scalar_lea.sflag [#allocation4], %s1691
        %s1693 = sand.u32 %s202, 1
        %s1694 = smul.addr %s1693, 2
        %s1695 = scalar_lea.vmem [#allocation3], %s1694
        // Predicated region
        $region49: #{tpu_custom_call.1} parent=47 // pred_check
          %p1696 = pneg %p212
        $region50: #{tpu_custom_call.1} parent=47 // pred_check_branch
          %1698 = sbr.rel (%p1696) target = $region52
        $region51: #{tpu_custom_call.1} parent=47 // pred_region
          %s1700 = ssub.s32 32, 32
          %1701 = vsyncadd %s1692, %s1700
          %s1702 = smul.addr %s26, 2
          %s1703 = smul.addr %s25, 2
          %s1704 = sadd.s32 %s1702, %s1703
          %s1705 = smul.addr %s1704, 16
          %s1706 = scalar_lea.hbm %s7, %s1705
          %s1708 = sshll.u32 %s1695, 4
          %s1709 = int_to_ptr.vmem [resolvable:$true] %s1708
          %1711 = dma.vmem_to_hbm [thread:$0]  %s1709, 32, %s1706, %s1692
        $region52: #{tpu_custom_call.1} parent=47 // pred_fallthru
          _
      $region48: #{tpu_custom_call.1} parent=5 // pred_fallthru
        _
      %p1712 = scmp.le.s32.totalorder 2, %s16
      // Predicated region
      $region53: #{tpu_custom_call.1} parent=5 // pred_check
        %p1713 = pneg %p1712
      $region54: #{tpu_custom_call.1} parent=5 // pred_check_branch
        %1715 = sbr.rel (%p1713) target = $region56
      $region55: #{tpu_custom_call.1} parent=5 // pred_region
        %s1716 = ssub.s32 %s16, 2
        // Predicated region
        $region57: #{tpu_custom_call.1} parent=55 // pred_check
          %p1717 = pneg %p218
        $region58: #{tpu_custom_call.1} parent=55 // pred_check_branch
          %1719 = sbr.rel (%p1717) target = $region60
        $region59: #{tpu_custom_call.1} parent=55 // pred_region
          %s1720 = sand.u32 %s203, 1
          %s1721 = scalar_lea.sflag [#allocation4], %s1720
          %s1722 = sand.u32 %s203, 1
          %s1723 = smul.addr %s1722, 2
          %s1724 = scalar_lea.vmem [#allocation3], %s1723
          %1725 = dma.done %s1721, 32
        $region60: #{tpu_custom_call.1} parent=55 // pred_fallthru
          _
      $region56: #{tpu_custom_call.1} parent=5 // pred_fallthru
        _
    $region6: #{tpu_custom_call.1} parent=1 // loop_footer
      %s20 = sadd.s32 1, %s16
    $region7: #{tpu_custom_call.1} parent=1 // loop_footer_branch
      %15 = sbr.rel target = $region3
    $region8: #{tpu_custom_call.1} parent=1 // loop_exit
      _
    %1726 = vsyncpa [#allocation4], 1
    %s1727 = scalar_lea.sflag [#allocation4], 1
    %1728 = vsyncpa %s1727, 1

</llo_original>
